<compile_context>
chip_gen: v7x
topology: tpu7x:2x2x1
jax: 0.10.0
libtpu: 0.0.40
codegen_flags: <defaults>
</compile_context>

<pallas_src>
import jax
import jax.numpy as jnp
import numpy as np
from jax import lax
from jax.experimental import pallas as pl
from jax.experimental.pallas import tpu as pltpu

_BN_EPS = 1e-5
_PARALLEL = pltpu.CompilerParams(dimension_semantics=("parallel",))


# --------------------------- host-side constants ---------------------------- #

def _conv_w_taps(w_oihw):
    """(Cout, Cin, 3, 3) -> (9, Cout, Cin), tap index k = dy*3 + dx."""
    c_out, c_in = w_oihw.shape[0], w_oihw.shape[1]
    return jnp.transpose(w_oihw, (2, 3, 0, 1)).reshape(9, c_out, c_in)


def _tap_masks(H, W):
    """(9, H*W) f32 validity masks for the 9 zero-padded 3x3 taps."""
    L = H * W
    ii, jj = np.divmod(np.arange(L), W)
    rows = []
    for di in (-1, 0, 1):
        for dj in (-1, 0, 1):
            ok = (ii + di >= 0) & (ii + di < H) & (jj + dj >= 0) & (jj + dj < W)
            rows.append(ok.astype(np.float32))
    return jnp.asarray(np.stack(rows, axis=0))


def _pool_sel(W):
    """(W, 2*Wo) selection: first Wo cols pick even columns, last Wo odd."""
    Wo = W // 2
    j = np.arange(W)[:, None]
    s = np.arange(Wo)[None, :]
    sel = np.concatenate([(j == 2 * s), (j == 2 * s + 1)], axis=1)
    return jnp.asarray(sel.astype(np.float32))


def _upconv_interleave_sel(W0):
    """(2*W0, 2*W0): rows [0:W0] scatter kw=0 to even cols, [W0:] to odd."""
    j = np.arange(W0)
    e = np.zeros((2 * W0, 2 * W0), np.float32)
    e[j, 2 * j] = 1.0
    e[W0 + j, 2 * j + 1] = 1.0
    return jnp.asarray(e)


# ----------------------------- in-kernel helpers ---------------------------- #

def _accum_conv3x3(acc, x, w_taps, masks, W, cdt):
    """acc += conv3x3(x): 9 accumulated MXU dots on pltpu.roll'ed taps.

    acc: (Cout, L) f32; x: (Cin, L) f32; w_taps: (9, Cout, Cin) in cdt;
    masks: (9, L) f32.  Rolls go to the XLU; masks/rolls stay f32 and the
    operands are cast to cdt only right before the dot (v5e-safe bf16 path).
    """
    L = x.shape[-1]
    k = 0
    for di in (-1, 0, 1):
        for dj in (-1, 0, 1):
            s = di * W + dj
            if s == 0:
                t = x
            else:
                t = pltpu.roll(x, (-s) % L, axis=1) * masks[k:k + 1, :]
            acc = acc + jnp.dot(w_taps[k], t.astype(cdt),
                                preferred_element_type=jnp.float32)
            k += 1
    return acc


def _pool2x2_rows(f, sel, W, down_ref):
    """MaxPool2d(2,2) on flat f: (C, H*W) -> lane-dense down_ref (C, Ho*Wo)."""
    L = f.shape[-1]
    H = L // W
    Ho, Wo = H // 2, W // 2
    for i in range(Ho):
        a = f[:, (2 * i) * W:(2 * i + 1) * W]
        b = f[:, (2 * i + 1) * W:(2 * i + 2) * W]
        r = jnp.maximum(a, b)                                     # (C, W)
        z = jnp.dot(r, sel, preferred_element_type=jnp.float32)   # (C, 2*Wo)
        d = jnp.maximum(z[:, :Wo], z[:, Wo:])                     # (C, Wo)
        down_ref[:, i * Wo:(i + 1) * Wo] = d.astype(down_ref.dtype)


# --------------------------------- kernels ---------------------------------- #

def _make_upconv_kernel(H0, W0, Chid, cdt):
    """ConvTranspose2d(k=2, s=2) emitting the interleaved NCHW layout directly.

    Output block is (Chid, H0, 2, 2*W0); flattened it is exactly the
    (2*H0, 2*W0) interleaved image, so no XLA phase-scatter pass is needed.
    """
    def kernel(x_ref, w_ref, b_ref, e_ref, o_ref):
        # x: (Cin, H0*W0); w rows ordered (kh, kw, c); b: (4*Chid, 1).
        z = jnp.dot(w_ref[...].astype(cdt), x_ref[...].astype(cdt),
                    preferred_element_type=jnp.float32) + b_ref[...]
        e = e_ref[...]                                            # (2W0, 2W0)
        for i in range(H0):
            zrow = z[:, i * W0:(i + 1) * W0]                      # (4*Chid, W0)
            for kh in range(2):
                za = zrow[(2 * kh) * Chid:(2 * kh + 1) * Chid, :]
                zb = zrow[(2 * kh + 1) * Chid:(2 * kh + 2) * Chid, :]
                ab = jnp.concatenate([za, zb], axis=1)            # (Chid, 2W0)
                p = jnp.dot(ab, e, preferred_element_type=jnp.float32)
                o_ref[:, i, kh, :] = p.astype(o_ref.dtype)
    return kernel


def _make_fused_conv_kernel(W, has_skip, use_bn, fuse_pool, cdt):
    """conv1(+skip)+ReLU+conv2 fused; `h` never leaves VMEM.

    BN on : outputs (y, per-batch sum, per-batch sum-of-squares).
    BN off: outputs (feat) or (feat, down) with ReLU (+MaxPool) fused in.
    """
    def kernel(*refs):
        idx = 0
        x_ref = refs[idx]; idx += 1
        s_ref = None
        if has_skip:
            s_ref = refs[idx]; idx += 1
        w1x_ref = refs[idx]; idx += 1
        w1s_ref = None
        if has_skip:
            w1s_ref = refs[idx]; idx += 1
        b1_ref = refs[idx]; idx += 1
        w2_ref = refs[idx]; idx += 1
        b2_ref = refs[idx]; idx += 1
        m_ref = refs[idx]; idx += 1
        sel_ref = None
        if fuse_pool:
            sel_ref = refs[idx]; idx += 1
        outs = refs[idx:]

        L = x_ref.shape[-1]
        Chid = w1x_ref.shape[1]
        Cout = w2_ref.shape[1]
        masks = m_ref[...]                                        # (9, L)

        # conv1 (+skip) + ReLU, bias folded into the accumulator init.
        acc1 = jnp.broadcast_to(b1_ref[...], (Chid, L))
        acc1 = _accum_conv3x3(acc1, x_ref[...].astype(jnp.float32),
                              w1x_ref[...].astype(cdt), masks, W, cdt)
        if has_skip:
            acc1 = _accum_conv3x3(acc1, s_ref[...].astype(jnp.float32),
                                  w1s_ref[...].astype(cdt), masks, W, cdt)
        h = jnp.maximum(acc1, 0.0)

        # conv2 (bias folded into accumulator init).
        acc2 = jnp.broadcast_to(b2_ref[...], (Cout, L))
        acc2 = _accum_conv3x3(acc2, h, w2_ref[...].astype(cdt), masks, W, cdt)

        if use_bn:
            y_ref, sum_ref, sq_ref = outs
            y_ref[...] = acc2.astype(y_ref.dtype)
            # Per-batch partial BN stats from the f32 accumulator.
            sum_ref[...] = jnp.sum(acc2, axis=1, keepdims=True)
            sq_ref[...] = jnp.sum(acc2 * acc2, axis=1, keepdims=True)
        else:
            feat = jnp.maximum(acc2, 0.0)
            if fuse_pool:
                feat_ref, down_ref = outs
                feat_ref[...] = feat.astype(feat_ref.dtype)
                _pool2x2_rows(feat, sel_ref[...], W, down_ref)
            else:
                (feat_ref,) = outs
                feat_ref[...] = feat.astype(feat_ref.dtype)
    return kernel


def _make_bn_relu_kernel(W, do_pool):
    """Fused BatchNorm(affine, batch stats) + ReLU (+ MaxPool2d(2,2))."""
    def kernel(*refs):
        if do_pool:
            y_ref, scale_ref, shift_ref, sel_ref, feat_ref, down_ref = refs
        else:
            y_ref, scale_ref, shift_ref, feat_ref = refs
        f = jnp.maximum(
            y_ref[...].astype(jnp.float32) * scale_ref[...] + shift_ref[...],
            0.0)
        feat_ref[...] = f.astype(feat_ref.dtype)
        if do_pool:
            _pool2x2_rows(f, sel_ref[...], W, down_ref)
    return kernel


# ------------------------------ pallas wrappers ------------------------------ #

def conv_transpose2x2(x_nchw, w_iohw, b, *, compute_dtype):
    N, Cin, H0, W0 = x_nchw.shape
    Chid = w_iohw.shape[1]
    L0 = H0 * W0
    xf = x_nchw.reshape(N, Cin, L0)
    # torch weight (Cin, Cout, 2, 2) -> rows ordered (kh, kw, c).
    w = jnp.transpose(w_iohw, (2, 3, 1, 0)).reshape(4 * Chid, Cin)
    b4 = jnp.tile(b, 4).reshape(4 * Chid, 1)
    e = _upconv_interleave_sel(W0)
    kernel = _make_upconv_kernel(H0, W0, Chid, compute_dtype)
    out = pl.pallas_call(
        kernel,
        out_shape=jax.ShapeDtypeStruct((N, Chid, H0, 2, 2 * W0), compute_dtype),
        grid=(N,),
        in_specs=[
            pl.BlockSpec((None, Cin, L0), lambda n: (n, 0, 0)),
            pl.BlockSpec((4 * Chid, Cin), lambda n: (0, 0)),
            pl.BlockSpec((4 * Chid, 1), lambda n: (0, 0)),
            pl.BlockSpec((2 * W0, 2 * W0), lambda n: (0, 0)),
        ],
        out_specs=pl.BlockSpec((None, Chid, H0, 2, 2 * W0),
                               lambda n: (n, 0, 0, 0, 0)),
        compiler_params=_PARALLEL,
    )(xf, w, b4, e)
    # Free (bitcast) reshape: (H0, 2, 2*W0) is the interleaved (2H0, 2W0).
    return out.reshape(N, Chid, 2 * H0, 2 * W0)


def fused_double_conv(x_nchw, skip_nchw, w1, b1, w2, b2, *, use_bn, downsample,
                      compute_dtype):
    N, Cx, H, W = x_nchw.shape
    L = H * W
    Chid = w1.shape[0]
    Cout = w2.shape[0]
    has_skip = skip_nchw is not None
    fuse_pool = downsample and not use_bn

    args = [x_nchw.reshape(N, Cx, L)]
    in_specs = [pl.BlockSpec((None, Cx, L), lambda n: (n, 0, 0))]
    if has_skip:
        Cs = skip_nchw.shape[1]
        args.append(skip_nchw.reshape(N, Cs, L).astype(jnp.float32))
        in_specs.append(pl.BlockSpec((None, Cs, L), lambda n: (n, 0, 0)))
        w1x, w1s = _conv_w_taps(w1[:, :Cx]), _conv_w_taps(w1[:, Cx:])
    else:
        w1x, w1s = _conv_w_taps(w1), None
    args.append(w1x)
    in_specs.append(pl.BlockSpec((9, Chid, Cx), lambda n: (0, 0, 0)))
    if has_skip:
        args.append(w1s)
        in_specs.append(pl.BlockSpec((9, Chid, w1s.shape[2]),
                                     lambda n: (0, 0, 0)))
    args.append(b1.reshape(Chid, 1))
    in_specs.append(pl.BlockSpec((Chid, 1), lambda n: (0, 0)))
    args.append(_conv_w_taps(w2))
    in_specs.append(pl.BlockSpec((9, Cout, Chid), lambda n: (0, 0, 0)))
    args.append(b2.reshape(Cout, 1))
    in_specs.append(pl.BlockSpec((Cout, 1), lambda n: (0, 0)))
    args.append(_tap_masks(H, W))
    in_specs.append(pl.BlockSpec((9, L), lambda n: (0, 0)))
    if fuse_pool:
        args.append(_pool_sel(W))
        in_specs.append(pl.BlockSpec((W, W), lambda n: (0, 0)))

    if use_bn:
        out_shape = (jax.ShapeDtypeStruct((N, Cout, L), compute_dtype),
                     jax.ShapeDtypeStruct((N, Cout, 1), jnp.float32),
                     jax.ShapeDtypeStruct((N, Cout, 1), jnp.float32))
        out_specs = [pl.BlockSpec((None, Cout, L), lambda n: (n, 0, 0)),
                     pl.BlockSpec((None, Cout, 1), lambda n: (n, 0, 0)),
                     pl.BlockSpec((None, Cout, 1), lambda n: (n, 0, 0))]
    elif fuse_pool:
        Lo = (H // 2) * (W // 2)
        out_shape = (jax.ShapeDtypeStruct((N, Cout, L), jnp.float32),
                     jax.ShapeDtypeStruct((N, Cout, Lo), jnp.float32))
        out_specs = [pl.BlockSpec((None, Cout, L), lambda n: (n, 0, 0)),
                     pl.BlockSpec((None, Cout, Lo), lambda n: (n, 0, 0))]
    else:
        out_shape = jax.ShapeDtypeStruct((N, Cout, L), jnp.float32)
        out_specs = pl.BlockSpec((None, Cout, L), lambda n: (n, 0, 0))

    kernel = _make_fused_conv_kernel(W, has_skip, use_bn, fuse_pool,
                                     compute_dtype)
    return pl.pallas_call(
        kernel, out_shape=out_shape, grid=(N,),
        in_specs=in_specs, out_specs=out_specs,
        compiler_params=_PARALLEL,
    )(*args)


def bn_relu_maybe_pool(y_flat, s, ss, gamma, beta, *, H, W, downsample):
    N, C, L = y_flat.shape
    n_elem = N * L
    mean = s.sum(axis=0) / n_elem                                 # (C, 1)
    var = jnp.maximum(ss.sum(axis=0) / n_elem - mean * mean, 0.0)
    scale = gamma.reshape(C, 1) / jnp.sqrt(var + _BN_EPS)
    shift = beta.reshape(C, 1) - mean * scale
    kernel = _make_bn_relu_kernel(W, downsample)
    if downsample:
        Lo = (H // 2) * (W // 2)
        feat, down = pl.pallas_call(
            kernel,
            out_shape=(jax.ShapeDtypeStruct((N, C, L), jnp.float32),
                       jax.ShapeDtypeStruct((N, C, Lo), jnp.float32)),
            grid=(N,),
            in_specs=[pl.BlockSpec((None, C, L), lambda n: (n, 0, 0)),
                      pl.BlockSpec((C, 1), lambda n: (0, 0)),
                      pl.BlockSpec((C, 1), lambda n: (0, 0)),
                      pl.BlockSpec((W, W), lambda n: (0, 0))],
            out_specs=[pl.BlockSpec((None, C, L), lambda n: (n, 0, 0)),
                       pl.BlockSpec((None, C, Lo), lambda n: (n, 0, 0))],
            compiler_params=_PARALLEL,
        )(y_flat, scale, shift, _pool_sel(W))
        return feat, down
    feat = pl.pallas_call(
        kernel,
        out_shape=jax.ShapeDtypeStruct((N, C, L), jnp.float32),
        grid=(N,),
        in_specs=[pl.BlockSpec((None, C, L), lambda n: (n, 0, 0)),
                  pl.BlockSpec((C, 1), lambda n: (0, 0)),
                  pl.BlockSpec((C, 1), lambda n: (0, 0))],
        out_specs=pl.BlockSpec((None, C, L), lambda n: (n, 0, 0)),
        compiler_params=_PARALLEL,
    )(y_flat, scale, shift)
    return feat, None


# ------------------------------ Block forward -------------------------------- #

def block_forward(features_nchw, skip_nchw, params, *, upsample, downsample,
                  use_batch_norm, compute_dtype=jnp.float32):
    """Pallas implementation of Block.forward. Inputs/outputs are NCHW f32."""
    x = features_nchw.astype(jnp.float32)
    if upsample:
        x = conv_transpose2x2(x, params["wt"], params["bt"],
                              compute_dtype=compute_dtype)
    N, _, H, W = x.shape
    Cout = params["w2"].shape[0]

    res = fused_double_conv(x, skip_nchw, params["w1"], params["b1"],
                            params["w2"], params["b2"],
                            use_bn=use_batch_norm, downsample=downsample,
                            compute_dtype=compute_dtype)

    if use_batch_norm:
        y, s, ss = res
        feat_flat, down_flat = bn_relu_maybe_pool(
            y, s, ss, params["gamma"], params["beta"],
            H=H, W=W, downsample=downsample)
    else:
        if downsample:
            feat_flat, down_flat = res
        else:
            feat_flat, down_flat = res, None

    feat = feat_flat.reshape(N, Cout, H, W)
    down = (None if down_flat is None
            else down_flat.reshape(N, Cout, H // 2, W // 2))
    return feat, down


# ----------------------------- pure-JAX reference --------------------------- #

def block_reference(features, skip, params, *, upsample, downsample,
                    use_batch_norm):
    x = features.astype(jnp.float32)
    if upsample:
        wt, bt = params["wt"], params["bt"]
        N, C, H, W = x.shape
        O = wt.shape[1]
        t = jnp.einsum("ncij,cokl->noikjl", x, wt)
        x = t.reshape(N, O, 2 * H, 2 * W) + bt[None, :, None, None]
    if skip is not None:
        x = jnp.concatenate([x, skip.astype(jnp.float32)], axis=1)
    x = lax.conv_general_dilated(x, params["w1"], (1, 1), ((1, 1), (1, 1)),
                                 dimension_numbers=("NCHW", "OIHW", "NCHW"))
    x = jnp.maximum(x + params["b1"][None, :, None, None], 0.0)
    x = lax.conv_general_dilated(x, params["w2"], (1, 1), ((1, 1), (1, 1)),
                                 dimension_numbers=("NCHW", "OIHW", "NCHW"))
    x = x + params["b2"][None, :, None, None]
    if use_batch_norm:
        mean = x.mean(axis=(0, 2, 3), keepdims=True)
        var = x.var(axis=(0, 2, 3), keepdims=True)
        x = (x - mean) / jnp.sqrt(var + _BN_EPS)
        x = x * params["gamma"][None, :, None, None] + \
            params["beta"][None, :, None, None]
    x = jnp.maximum(x, 0.0)
    if downsample:
        N, C, H, W = x.shape
        d = x.reshape(N, C, H // 2, 2, W // 2, 2).max(axis=(3, 5))
    else:
        d = None
    return x, d


# ----------------------------------- main ------------------------------------ #

if __name__ == "__main__":
    N = 2
    input_channels, hidden_channels, output_channels = 16, 8, 8
    skip_channels = input_channels - hidden_channels
    H0, W0 = 8, 8

    key = jax.random.PRNGKey(0)
    ks = jax.random.split(key, 11)
    params = {
        "wt": 0.1 * jax.random.normal(ks[0], (input_channels, hidden_channels, 2, 2), jnp.float32),
        "bt": 0.1 * jax.random.normal(ks[1], (hidden_channels,), jnp.float32),
        "w1": 0.1 * jax.random.normal(ks[2], (hidden_channels, input_channels, 3, 3), jnp.float32),
        "b1": 0.1 * jax.random.normal(ks[3], (hidden_channels,), jnp.float32),
        "w2": 0.1 * jax.random.normal(ks[4], (output_channels, hidden_channels, 3, 3), jnp.float32),
        "b2": 0.1 * jax.random.normal(ks[5], (output_channels,), jnp.float32),
        "gamma": 1.0 + 0.1 * jax.random.normal(ks[6], (output_channels,), jnp.float32),
        "beta": 0.1 * jax.random.normal(ks[7], (output_channels,), jnp.float32),
    }
    features = jax.random.normal(ks[8], (N, input_channels, H0, W0), jnp.float32)
    skip = jax.random.normal(ks[9], (N, skip_channels, 2 * H0, 2 * W0), jnp.float32)

    # Decoder config: upsample + skip concat + BN + pool  (f32, tight check).
    flags = dict(upsample=True, downsample=True, use_batch_norm=True)
    feat, down = block_forward(features, skip, params, **flags)
    feat = jax.block_until_ready(feat)
    down = jax.block_until_ready(down)
    feat_ref, down_ref = block_reference(features, skip, params, **flags)
    np.testing.assert_allclose(np.asarray(feat), np.asarray(feat_ref),
                               rtol=2e-4, atol=2e-4)
    np.testing.assert_allclose(np.asarray(down), np.asarray(down_ref),
                               rtol=2e-4, atol=2e-4)
    assert feat.shape == (N, output_channels, 2 * H0, 2 * W0)
    assert down.shape == (N, output_channels, H0, W0)

    # Same config on the bf16 MXU path (v6e/v7x): f32 accumulation + f32 BN
    # stats bound the error; loose relative-norm check.
    feat_b, down_b = block_forward(features, skip, params,
                                   compute_dtype=jnp.bfloat16, **flags)
    feat_b = jax.block_until_ready(feat_b)
    down_b = jax.block_until_ready(down_b)

    def _rel(a, b):
        a = np.asarray(a, np.float32)
        b = np.asarray(b, np.float32)
        return float(np.linalg.norm(a - b) / max(np.linalg.norm(b), 1e-6))

    assert _rel(feat_b, feat_ref) < 0.08, _rel(feat_b, feat_ref)
    assert _rel(down_b, down_ref) < 0.08, _rel(down_b, down_ref)

    # Encoder-style config: no upsample / skip / BN, fused ReLU+MaxPool path.
    features_enc = jax.random.normal(
        ks[10], (N, input_channels, 2 * H0, 2 * W0), jnp.float32)
    flags2 = dict(upsample=False, downsample=True, use_batch_norm=False)
    feat2, down2 = block_forward(features_enc, None, params, **flags2)
    feat2 = jax.block_until_ready(feat2)
    down2 = jax.block_until_ready(down2)
    feat2_ref, down2_ref = block_reference(features_enc, None, params, **flags2)
    np.testing.assert_allclose(np.asarray(feat2), np.asarray(feat2_ref),
                               rtol=2e-4, atol=2e-4)
    np.testing.assert_allclose(np.asarray(down2), np.asarray(down2_ref),
                               rtol=2e-4, atol=2e-4)

    print("KERNEL_OK")
</pallas_src>

<mosaic_0001>
module attributes {stable_mosaic.version = 11 : i64} {
  func.func @kernel(%arg0: i32, %arg1: memref<1x16x64xf32, #tpu.memory_space<vmem>>, %arg2: memref<32x16xf32, #tpu.memory_space<vmem>>, %arg3: memref<32x1xf32, #tpu.memory_space<vmem>>, %arg4: memref<16x16xf32, #tpu.memory_space<vmem>>, %arg5: memref<1x8x8x2x16xf32, #tpu.memory_space<vmem>>) attributes {dimension_semantics = [#tpu.dimension_semantics<parallel>], iteration_bounds = array<i64: 2>, scalar_prefetch = 0 : i64, scratch_operands = 0 : i64, tpu.core_type = #tpu.core_type<tc>, window_params = [{transform_indices = @transform_0, window_bounds = array<i64: 1, 16, 64>}, {pipeline_mode = #tpu.pipeline_mode<synchronous>, transform_indices = @transform_1, window_bounds = array<i64: 32, 16>}, {pipeline_mode = #tpu.pipeline_mode<synchronous>, transform_indices = @transform_2, window_bounds = array<i64: 32, 1>}, {pipeline_mode = #tpu.pipeline_mode<synchronous>, transform_indices = @transform_3, window_bounds = array<i64: 16, 16>}, {transform_indices = @transform_4, window_bounds = array<i64: 1, 8, 8, 2, 16>}]} {
    %c0 = arith.constant 0 : index
    %c0_0 = arith.constant 0 : index
    %0 = vector.load %arg2[%c0, %c0_0] : memref<32x16xf32, #tpu.memory_space<vmem>>, vector<32x16xf32>
    %c0_1 = arith.constant 0 : index
    %c0_2 = arith.constant 0 : index
    %c0_3 = arith.constant 0 : index
    %1 = vector.load %arg1[%c0_1, %c0_2, %c0_3] : memref<1x16x64xf32, #tpu.memory_space<vmem>>, vector<1x16x64xf32>
    %2 = vector.shape_cast %1 : vector<1x16x64xf32> to vector<16x64xf32>
    %cst = arith.constant dense<0.000000e+00> : vector<32x64xf32>
    %3 = tpu.matmul %0, %2, %cst {dimension_numbers = #tpu.dot_dimension_numbers<[1], [0], [0], [1], [0, 0, 1, 1], [], []>} : vector<32x16xf32>, vector<16x64xf32>, vector<32x64xf32> -> vector<32x64xf32>
    %c0_4 = arith.constant 0 : index
    %c0_5 = arith.constant 0 : index
    %4 = vector.load %arg3[%c0_4, %c0_5] : memref<32x1xf32, #tpu.memory_space<vmem>>, vector<32x1xf32>
    %5 = vector.broadcast %4 : vector<32x1xf32> to vector<32x64xf32>
    %6 = arith.addf %3, %5 : vector<32x64xf32>
    %c0_6 = arith.constant 0 : index
    %c0_7 = arith.constant 0 : index
    %7 = vector.load %arg4[%c0_6, %c0_7] : memref<16x16xf32, #tpu.memory_space<vmem>>, vector<16x16xf32>
    %8 = vector.extract_strided_slice %6 {offsets = [0, 0], sizes = [32, 8], strides = [1, 1]} : vector<32x64xf32> to vector<32x8xf32>
    %9 = vector.extract_strided_slice %8 {offsets = [0, 0], sizes = [8, 8], strides = [1, 1]} : vector<32x8xf32> to vector<8x8xf32>
    %10 = vector.extract_strided_slice %8 {offsets = [8, 0], sizes = [8, 8], strides = [1, 1]} : vector<32x8xf32> to vector<8x8xf32>
    %11 = tpu.concatenate %9, %10 in 1 : vector<8x8xf32>, vector<8x8xf32> -> vector<8x16xf32>
    %cst_8 = arith.constant dense<0.000000e+00> : vector<8x16xf32>
    %12 = tpu.matmul %11, %7, %cst_8 {dimension_numbers = #tpu.dot_dimension_numbers<[1], [0], [0], [1], [0, 0, 1, 1], [], []>} : vector<8x16xf32>, vector<16x16xf32>, vector<8x16xf32> -> vector<8x16xf32>
    %c0_9 = arith.constant 0 : index
    %c0_10 = arith.constant 0 : index
    %c0_11 = arith.constant 0 : index
    %c0_12 = arith.constant 0 : index
    %c0_13 = arith.constant 0 : index
    %13 = vector.load %arg5[%c0_9, %c0_10, %c0_11, %c0_12, %c0_13] : memref<1x8x8x2x16xf32, #tpu.memory_space<vmem>>, vector<1x8x1x1x16xf32>
    %14 = vector.shape_cast %13 : vector<1x8x1x1x16xf32> to vector<8x16xf32>
    %15 = vector.shape_cast %12 : vector<8x16xf32> to vector<1x8x1x1x16xf32>
    tpu.vector_store %arg5[%c0_9, %c0_10, %c0_11, %c0_12, %c0_13], %15 {strides = array<i32>} : memref<1x8x8x2x16xf32, #tpu.memory_space<vmem>>, vector<1x8x1x1x16xf32>,
    %16 = vector.extract_strided_slice %8 {offsets = [16, 0], sizes = [8, 8], strides = [1, 1]} : vector<32x8xf32> to vector<8x8xf32>
    %17 = vector.extract_strided_slice %8 {offsets = [24, 0], sizes = [8, 8], strides = [1, 1]} : vector<32x8xf32> to vector<8x8xf32>
    %18 = tpu.concatenate %16, %17 in 1 : vector<8x8xf32>, vector<8x8xf32> -> vector<8x16xf32>
    %cst_14 = arith.constant dense<0.000000e+00> : vector<8x16xf32>
    %19 = tpu.matmul %18, %7, %cst_14 {dimension_numbers = #tpu.dot_dimension_numbers<[1], [0], [0], [1], [0, 0, 1, 1], [], []>} : vector<8x16xf32>, vector<16x16xf32>, vector<8x16xf32> -> vector<8x16xf32>
    %c0_15 = arith.constant 0 : index
    %c0_16 = arith.constant 0 : index
    %c0_17 = arith.constant 0 : index
    %c1 = arith.constant 1 : index
    %c0_18 = arith.constant 0 : index
    %20 = vector.load %arg5[%c0_15, %c0_16, %c0_17, %c1, %c0_18] : memref<1x8x8x2x16xf32, #tpu.memory_space<vmem>>, vector<1x8x1x1x16xf32>
    %21 = vector.shape_cast %20 : vector<1x8x1x1x16xf32> to vector<8x16xf32>
    %22 = vector.shape_cast %19 : vector<8x16xf32> to vector<1x8x1x1x16xf32>
    tpu.vector_store %arg5[%c0_15, %c0_16, %c0_17, %c1, %c0_18], %22 {strides = array<i32>} : memref<1x8x8x2x16xf32, #tpu.memory_space<vmem>>, vector<1x8x1x1x16xf32>,
    %23 = vector.extract_strided_slice %6 {offsets = [0, 8], sizes = [32, 8], strides = [1, 1]} : vector<32x64xf32> to vector<32x8xf32>
    %24 = vector.extract_strided_slice %23 {offsets = [0, 0], sizes = [8, 8], strides = [1, 1]} : vector<32x8xf32> to vector<8x8xf32>
    %25 = vector.extract_strided_slice %23 {offsets = [8, 0], sizes = [8, 8], strides = [1, 1]} : vector<32x8xf32> to vector<8x8xf32>
    %26 = tpu.concatenate %24, %25 in 1 : vector<8x8xf32>, vector<8x8xf32> -> vector<8x16xf32>
    %cst_19 = arith.constant dense<0.000000e+00> : vector<8x16xf32>
    %27 = tpu.matmul %26, %7, %cst_19 {dimension_numbers = #tpu.dot_dimension_numbers<[1], [0], [0], [1], [0, 0, 1, 1], [], []>} : vector<8x16xf32>, vector<16x16xf32>, vector<8x16xf32> -> vector<8x16xf32>
    %c0_20 = arith.constant 0 : index
    %c0_21 = arith.constant 0 : index
    %c1_22 = arith.constant 1 : index
    %c0_23 = arith.constant 0 : index
    %c0_24 = arith.constant 0 : index
    %28 = vector.load %arg5[%c0_20, %c0_21, %c1_22, %c0_23, %c0_24] : memref<1x8x8x2x16xf32, #tpu.memory_space<vmem>>, vector<1x8x1x1x16xf32>
    %29 = vector.shape_cast %28 : vector<1x8x1x1x16xf32> to vector<8x16xf32>
    %30 = vector.shape_cast %27 : vector<8x16xf32> to vector<1x8x1x1x16xf32>
    tpu.vector_store %arg5[%c0_20, %c0_21, %c1_22, %c0_23, %c0_24], %30 {strides = array<i32>} : memref<1x8x8x2x16xf32, #tpu.memory_space<vmem>>, vector<1x8x1x1x16xf32>,
    %31 = vector.extract_strided_slice %23 {offsets = [16, 0], sizes = [8, 8], strides = [1, 1]} : vector<32x8xf32> to vector<8x8xf32>
    %32 = vector.extract_strided_slice %23 {offsets = [24, 0], sizes = [8, 8], strides = [1, 1]} : vector<32x8xf32> to vector<8x8xf32>
    %33 = tpu.concatenate %31, %32 in 1 : vector<8x8xf32>, vector<8x8xf32> -> vector<8x16xf32>
    %cst_25 = arith.constant dense<0.000000e+00> : vector<8x16xf32>
    %34 = tpu.matmul %33, %7, %cst_25 {dimension_numbers = #tpu.dot_dimension_numbers<[1], [0], [0], [1], [0, 0, 1, 1], [], []>} : vector<8x16xf32>, vector<16x16xf32>, vector<8x16xf32> -> vector<8x16xf32>
    %c0_26 = arith.constant 0 : index
    %c0_27 = arith.constant 0 : index
    %c1_28 = arith.constant 1 : index
    %c1_29 = arith.constant 1 : index
    %c0_30 = arith.constant 0 : index
    %35 = vector.load %arg5[%c0_26, %c0_27, %c1_28, %c1_29, %c0_30] : memref<1x8x8x2x16xf32, #tpu.memory_space<vmem>>, vector<1x8x1x1x16xf32>
    %36 = vector.shape_cast %35 : vector<1x8x1x1x16xf32> to vector<8x16xf32>
    %37 = vector.shape_cast %34 : vector<8x16xf32> to vector<1x8x1x1x16xf32>
    tpu.vector_store %arg5[%c0_26, %c0_27, %c1_28, %c1_29, %c0_30], %37 {strides = array<i32>} : memref<1x8x8x2x16xf32, #tpu.memory_space<vmem>>, vector<1x8x1x1x16xf32>,
    %38 = vector.extract_strided_slice %6 {offsets = [0, 16], sizes = [32, 8], strides = [1, 1]} : vector<32x64xf32> to vector<32x8xf32>
    %39 = vector.extract_strided_slice %38 {offsets = [0, 0], sizes = [8, 8], strides = [1, 1]} : vector<32x8xf32> to vector<8x8xf32>
    %40 = vector.extract_strided_slice %38 {offsets = [8, 0], sizes = [8, 8], strides = [1, 1]} : vector<32x8xf32> to vector<8x8xf32>
    %41 = tpu.concatenate %39, %40 in 1 : vector<8x8xf32>, vector<8x8xf32> -> vector<8x16xf32>
    %cst_31 = arith.constant dense<0.000000e+00> : vector<8x16xf32>
    %42 = tpu.matmul %41, %7, %cst_31 {dimension_numbers = #tpu.dot_dimension_numbers<[1], [0], [0], [1], [0, 0, 1, 1], [], []>} : vector<8x16xf32>, vector<16x16xf32>, vector<8x16xf32> -> vector<8x16xf32>
    %c0_32 = arith.constant 0 : index
    %c0_33 = arith.constant 0 : index
    %c2 = arith.constant 2 : index
    %c0_34 = arith.constant 0 : index
    %c0_35 = arith.constant 0 : index
    %43 = vector.load %arg5[%c0_32, %c0_33, %c2, %c0_34, %c0_35] : memref<1x8x8x2x16xf32, #tpu.memory_space<vmem>>, vector<1x8x1x1x16xf32>
    %44 = vector.shape_cast %43 : vector<1x8x1x1x16xf32> to vector<8x16xf32>
    %45 = vector.shape_cast %42 : vector<8x16xf32> to vector<1x8x1x1x16xf32>
    tpu.vector_store %arg5[%c0_32, %c0_33, %c2, %c0_34, %c0_35], %45 {strides = array<i32>} : memref<1x8x8x2x16xf32, #tpu.memory_space<vmem>>, vector<1x8x1x1x16xf32>,
    %46 = vector.extract_strided_slice %38 {offsets = [16, 0], sizes = [8, 8], strides = [1, 1]} : vector<32x8xf32> to vector<8x8xf32>
    %47 = vector.extract_strided_slice %38 {offsets = [24, 0], sizes = [8, 8], strides = [1, 1]} : vector<32x8xf32> to vector<8x8xf32>
    %48 = tpu.concatenate %46, %47 in 1 : vector<8x8xf32>, vector<8x8xf32> -> vector<8x16xf32>
    %cst_36 = arith.constant dense<0.000000e+00> : vector<8x16xf32>
    %49 = tpu.matmul %48, %7, %cst_36 {dimension_numbers = #tpu.dot_dimension_numbers<[1], [0], [0], [1], [0, 0, 1, 1], [], []>} : vector<8x16xf32>, vector<16x16xf32>, vector<8x16xf32> -> vector<8x16xf32>
    %c0_37 = arith.constant 0 : index
    %c0_38 = arith.constant 0 : index
    %c2_39 = arith.constant 2 : index
    %c1_40 = arith.constant 1 : index
    %c0_41 = arith.constant 0 : index
    %50 = vector.load %arg5[%c0_37, %c0_38, %c2_39, %c1_40, %c0_41] : memref<1x8x8x2x16xf32, #tpu.memory_space<vmem>>, vector<1x8x1x1x16xf32>
    %51 = vector.shape_cast %50 : vector<1x8x1x1x16xf32> to vector<8x16xf32>
    %52 = vector.shape_cast %49 : vector<8x16xf32> to vector<1x8x1x1x16xf32>
    tpu.vector_store %arg5[%c0_37, %c0_38, %c2_39, %c1_40, %c0_41], %52 {strides = array<i32>} : memref<1x8x8x2x16xf32, #tpu.memory_space<vmem>>, vector<1x8x1x1x16xf32>,
    %53 = vector.extract_strided_slice %6 {offsets = [0, 24], sizes = [32, 8], strides = [1, 1]} : vector<32x64xf32> to vector<32x8xf32>
    %54 = vector.extract_strided_slice %53 {offsets = [0, 0], sizes = [8, 8], strides = [1, 1]} : vector<32x8xf32> to vector<8x8xf32>
    %55 = vector.extract_strided_slice %53 {offsets = [8, 0], sizes = [8, 8], strides = [1, 1]} : vector<32x8xf32> to vector<8x8xf32>
    %56 = tpu.concatenate %54, %55 in 1 : vector<8x8xf32>, vector<8x8xf32> -> vector<8x16xf32>
    %cst_42 = arith.constant dense<0.000000e+00> : vector<8x16xf32>
    %57 = tpu.matmul %56, %7, %cst_42 {dimension_numbers = #tpu.dot_dimension_numbers<[1], [0], [0], [1], [0, 0, 1, 1], [], []>} : vector<8x16xf32>, vector<16x16xf32>, vector<8x16xf32> -> vector<8x16xf32>
    %c0_43 = arith.constant 0 : index
    %c0_44 = arith.constant 0 : index
    %c3 = arith.constant 3 : index
    %c0_45 = arith.constant 0 : index
    %c0_46 = arith.constant 0 : index
    %58 = vector.load %arg5[%c0_43, %c0_44, %c3, %c0_45, %c0_46] : memref<1x8x8x2x16xf32, #tpu.memory_space<vmem>>, vector<1x8x1x1x16xf32>
    %59 = vector.shape_cast %58 : vector<1x8x1x1x16xf32> to vector<8x16xf32>
    %60 = vector.shape_cast %57 : vector<8x16xf32> to vector<1x8x1x1x16xf32>
    tpu.vector_store %arg5[%c0_43, %c0_44, %c3, %c0_45, %c0_46], %60 {strides = array<i32>} : memref<1x8x8x2x16xf32, #tpu.memory_space<vmem>>, vector<1x8x1x1x16xf32>,
    %61 = vector.extract_strided_slice %53 {offsets = [16, 0], sizes = [8, 8], strides = [1, 1]} : vector<32x8xf32> to vector<8x8xf32>
    %62 = vector.extract_strided_slice %53 {offsets = [24, 0], sizes = [8, 8], strides = [1, 1]} : vector<32x8xf32> to vector<8x8xf32>
    %63 = tpu.concatenate %61, %62 in 1 : vector<8x8xf32>, vector<8x8xf32> -> vector<8x16xf32>
    %cst_47 = arith.constant dense<0.000000e+00> : vector<8x16xf32>
    %64 = tpu.matmul %63, %7, %cst_47 {dimension_numbers = #tpu.dot_dimension_numbers<[1], [0], [0], [1], [0, 0, 1, 1], [], []>} : vector<8x16xf32>, vector<16x16xf32>, vector<8x16xf32> -> vector<8x16xf32>
    %c0_48 = arith.constant 0 : index
    %c0_49 = arith.constant 0 : index
    %c3_50 = arith.constant 3 : index
    %c1_51 = arith.constant 1 : index
    %c0_52 = arith.constant 0 : index
    %65 = vector.load %arg5[%c0_48, %c0_49, %c3_50, %c1_51, %c0_52] : memref<1x8x8x2x16xf32, #tpu.memory_space<vmem>>, vector<1x8x1x1x16xf32>
    %66 = vector.shape_cast %65 : vector<1x8x1x1x16xf32> to vector<8x16xf32>
    %67 = vector.shape_cast %64 : vector<8x16xf32> to vector<1x8x1x1x16xf32>
    tpu.vector_store %arg5[%c0_48, %c0_49, %c3_50, %c1_51, %c0_52], %67 {strides = array<i32>} : memref<1x8x8x2x16xf32, #tpu.memory_space<vmem>>, vector<1x8x1x1x16xf32>,
    %68 = vector.extract_strided_slice %6 {offsets = [0, 32], sizes = [32, 8], strides = [1, 1]} : vector<32x64xf32> to vector<32x8xf32>
    %69 = vector.extract_strided_slice %68 {offsets = [0, 0], sizes = [8, 8], strides = [1, 1]} : vector<32x8xf32> to vector<8x8xf32>
    %70 = vector.extract_strided_slice %68 {offsets = [8, 0], sizes = [8, 8], strides = [1, 1]} : vector<32x8xf32> to vector<8x8xf32>
    %71 = tpu.concatenate %69, %70 in 1 : vector<8x8xf32>, vector<8x8xf32> -> vector<8x16xf32>
    %cst_53 = arith.constant dense<0.000000e+00> : vector<8x16xf32>
    %72 = tpu.matmul %71, %7, %cst_53 {dimension_numbers = #tpu.dot_dimension_numbers<[1], [0], [0], [1], [0, 0, 1, 1], [], []>} : vector<8x16xf32>, vector<16x16xf32>, vector<8x16xf32> -> vector<8x16xf32>
    %c0_54 = arith.constant 0 : index
    %c0_55 = arith.constant 0 : index
    %c4 = arith.constant 4 : index
    %c0_56 = arith.constant 0 : index
    %c0_57 = arith.constant 0 : index
    %73 = vector.load %arg5[%c0_54, %c0_55, %c4, %c0_56, %c0_57] : memref<1x8x8x2x16xf32, #tpu.memory_space<vmem>>, vector<1x8x1x1x16xf32>
    %74 = vector.shape_cast %73 : vector<1x8x1x1x16xf32> to vector<8x16xf32>
    %75 = vector.shape_cast %72 : vector<8x16xf32> to vector<1x8x1x1x16xf32>
    tpu.vector_store %arg5[%c0_54, %c0_55, %c4, %c0_56, %c0_57], %75 {strides = array<i32>} : memref<1x8x8x2x16xf32, #tpu.memory_space<vmem>>, vector<1x8x1x1x16xf32>,
    %76 = vector.extract_strided_slice %68 {offsets = [16, 0], sizes = [8, 8], strides = [1, 1]} : vector<32x8xf32> to vector<8x8xf32>
    %77 = vector.extract_strided_slice %68 {offsets = [24, 0], sizes = [8, 8], strides = [1, 1]} : vector<32x8xf32> to vector<8x8xf32>
    %78 = tpu.concatenate %76, %77 in 1 : vector<8x8xf32>, vector<8x8xf32> -> vector<8x16xf32>
    %cst_58 = arith.constant dense<0.000000e+00> : vector<8x16xf32>
    %79 = tpu.matmul %78, %7, %cst_58 {dimension_numbers = #tpu.dot_dimension_numbers<[1], [0], [0], [1], [0, 0, 1, 1], [], []>} : vector<8x16xf32>, vector<16x16xf32>, vector<8x16xf32> -> vector<8x16xf32>
    %c0_59 = arith.constant 0 : index
    %c0_60 = arith.constant 0 : index
    %c4_61 = arith.constant 4 : index
    %c1_62 = arith.constant 1 : index
    %c0_63 = arith.constant 0 : index
    %80 = vector.load %arg5[%c0_59, %c0_60, %c4_61, %c1_62, %c0_63] : memref<1x8x8x2x16xf32, #tpu.memory_space<vmem>>, vector<1x8x1x1x16xf32>
    %81 = vector.shape_cast %80 : vector<1x8x1x1x16xf32> to vector<8x16xf32>
    %82 = vector.shape_cast %79 : vector<8x16xf32> to vector<1x8x1x1x16xf32>
    tpu.vector_store %arg5[%c0_59, %c0_60, %c4_61, %c1_62, %c0_63], %82 {strides = array<i32>} : memref<1x8x8x2x16xf32, #tpu.memory_space<vmem>>, vector<1x8x1x1x16xf32>,
    %83 = vector.extract_strided_slice %6 {offsets = [0, 40], sizes = [32, 8], strides = [1, 1]} : vector<32x64xf32> to vector<32x8xf32>
    %84 = vector.extract_strided_slice %83 {offsets = [0, 0], sizes = [8, 8], strides = [1, 1]} : vector<32x8xf32> to vector<8x8xf32>
    %85 = vector.extract_strided_slice %83 {offsets = [8, 0], sizes = [8, 8], strides = [1, 1]} : vector<32x8xf32> to vector<8x8xf32>
    %86 = tpu.concatenate %84, %85 in 1 : vector<8x8xf32>, vector<8x8xf32> -> vector<8x16xf32>
    %cst_64 = arith.constant dense<0.000000e+00> : vector<8x16xf32>
    %87 = tpu.matmul %86, %7, %cst_64 {dimension_numbers = #tpu.dot_dimension_numbers<[1], [0], [0], [1], [0, 0, 1, 1], [], []>} : vector<8x16xf32>, vector<16x16xf32>, vector<8x16xf32> -> vector<8x16xf32>
    %c0_65 = arith.constant 0 : index
    %c0_66 = arith.constant 0 : index
    %c5 = arith.constant 5 : index
    %c0_67 = arith.constant 0 : index
    %c0_68 = arith.constant 0 : index
    %88 = vector.load %arg5[%c0_65, %c0_66, %c5, %c0_67, %c0_68] : memref<1x8x8x2x16xf32, #tpu.memory_space<vmem>>, vector<1x8x1x1x16xf32>
    %89 = vector.shape_cast %88 : vector<1x8x1x1x16xf32> to vector<8x16xf32>
    %90 = vector.shape_cast %87 : vector<8x16xf32> to vector<1x8x1x1x16xf32>
    tpu.vector_store %arg5[%c0_65, %c0_66, %c5, %c0_67, %c0_68], %90 {strides = array<i32>} : memref<1x8x8x2x16xf32, #tpu.memory_space<vmem>>, vector<1x8x1x1x16xf32>,
    %91 = vector.extract_strided_slice %83 {offsets = [16, 0], sizes = [8, 8], strides = [1, 1]} : vector<32x8xf32> to vector<8x8xf32>
    %92 = vector.extract_strided_slice %83 {offsets = [24, 0], sizes = [8, 8], strides = [1, 1]} : vector<32x8xf32> to vector<8x8xf32>
    %93 = tpu.concatenate %91, %92 in 1 : vector<8x8xf32>, vector<8x8xf32> -> vector<8x16xf32>
    %cst_69 = arith.constant dense<0.000000e+00> : vector<8x16xf32>
    %94 = tpu.matmul %93, %7, %cst_69 {dimension_numbers = #tpu.dot_dimension_numbers<[1], [0], [0], [1], [0, 0, 1, 1], [], []>} : vector<8x16xf32>, vector<16x16xf32>, vector<8x16xf32> -> vector<8x16xf32>
    %c0_70 = arith.constant 0 : index
    %c0_71 = arith.constant 0 : index
    %c5_72 = arith.constant 5 : index
    %c1_73 = arith.constant 1 : index
    %c0_74 = arith.constant 0 : index
    %95 = vector.load %arg5[%c0_70, %c0_71, %c5_72, %c1_73, %c0_74] : memref<1x8x8x2x16xf32, #tpu.memory_space<vmem>>, vector<1x8x1x1x16xf32>
    %96 = vector.shape_cast %95 : vector<1x8x1x1x16xf32> to vector<8x16xf32>
    %97 = vector.shape_cast %94 : vector<8x16xf32> to vector<1x8x1x1x16xf32>
    tpu.vector_store %arg5[%c0_70, %c0_71, %c5_72, %c1_73, %c0_74], %97 {strides = array<i32>} : memref<1x8x8x2x16xf32, #tpu.memory_space<vmem>>, vector<1x8x1x1x16xf32>,
    %98 = vector.extract_strided_slice %6 {offsets = [0, 48], sizes = [32, 8], strides = [1, 1]} : vector<32x64xf32> to vector<32x8xf32>
    %99 = vector.extract_strided_slice %98 {offsets = [0, 0], sizes = [8, 8], strides = [1, 1]} : vector<32x8xf32> to vector<8x8xf32>
    %100 = vector.extract_strided_slice %98 {offsets = [8, 0], sizes = [8, 8], strides = [1, 1]} : vector<32x8xf32> to vector<8x8xf32>
    %101 = tpu.concatenate %99, %100 in 1 : vector<8x8xf32>, vector<8x8xf32> -> vector<8x16xf32>
    %cst_75 = arith.constant dense<0.000000e+00> : vector<8x16xf32>
    %102 = tpu.matmul %101, %7, %cst_75 {dimension_numbers = #tpu.dot_dimension_numbers<[1], [0], [0], [1], [0, 0, 1, 1], [], []>} : vector<8x16xf32>, vector<16x16xf32>, vector<8x16xf32> -> vector<8x16xf32>
    %c0_76 = arith.constant 0 : index
    %c0_77 = arith.constant 0 : index
    %c6 = arith.constant 6 : index
    %c0_78 = arith.constant 0 : index
    %c0_79 = arith.constant 0 : index
    %103 = vector.load %arg5[%c0_76, %c0_77, %c6, %c0_78, %c0_79] : memref<1x8x8x2x16xf32, #tpu.memory_space<vmem>>, vector<1x8x1x1x16xf32>
    %104 = vector.shape_cast %103 : vector<1x8x1x1x16xf32> to vector<8x16xf32>
    %105 = vector.shape_cast %102 : vector<8x16xf32> to vector<1x8x1x1x16xf32>
    tpu.vector_store %arg5[%c0_76, %c0_77, %c6, %c0_78, %c0_79], %105 {strides = array<i32>} : memref<1x8x8x2x16xf32, #tpu.memory_space<vmem>>, vector<1x8x1x1x16xf32>,
    %106 = vector.extract_strided_slice %98 {offsets = [16, 0], sizes = [8, 8], strides = [1, 1]} : vector<32x8xf32> to vector<8x8xf32>
    %107 = vector.extract_strided_slice %98 {offsets = [24, 0], sizes = [8, 8], strides = [1, 1]} : vector<32x8xf32> to vector<8x8xf32>
    %108 = tpu.concatenate %106, %107 in 1 : vector<8x8xf32>, vector<8x8xf32> -> vector<8x16xf32>
    %cst_80 = arith.constant dense<0.000000e+00> : vector<8x16xf32>
    %109 = tpu.matmul %108, %7, %cst_80 {dimension_numbers = #tpu.dot_dimension_numbers<[1], [0], [0], [1], [0, 0, 1, 1], [], []>} : vector<8x16xf32>, vector<16x16xf32>, vector<8x16xf32> -> vector<8x16xf32>
    %c0_81 = arith.constant 0 : index
    %c0_82 = arith.constant 0 : index
    %c6_83 = arith.constant 6 : index
    %c1_84 = arith.constant 1 : index
    %c0_85 = arith.constant 0 : index
    %110 = vector.load %arg5[%c0_81, %c0_82, %c6_83, %c1_84, %c0_85] : memref<1x8x8x2x16xf32, #tpu.memory_space<vmem>>, vector<1x8x1x1x16xf32>
    %111 = vector.shape_cast %110 : vector<1x8x1x1x16xf32> to vector<8x16xf32>
    %112 = vector.shape_cast %109 : vector<8x16xf32> to vector<1x8x1x1x16xf32>
    tpu.vector_store %arg5[%c0_81, %c0_82, %c6_83, %c1_84, %c0_85], %112 {strides = array<i32>} : memref<1x8x8x2x16xf32, #tpu.memory_space<vmem>>, vector<1x8x1x1x16xf32>,
    %113 = vector.extract_strided_slice %6 {offsets = [0, 56], sizes = [32, 8], strides = [1, 1]} : vector<32x64xf32> to vector<32x8xf32>
    %114 = vector.extract_strided_slice %113 {offsets = [0, 0], sizes = [8, 8], strides = [1, 1]} : vector<32x8xf32> to vector<8x8xf32>
    %115 = vector.extract_strided_slice %113 {offsets = [8, 0], sizes = [8, 8], strides = [1, 1]} : vector<32x8xf32> to vector<8x8xf32>
    %116 = tpu.concatenate %114, %115 in 1 : vector<8x8xf32>, vector<8x8xf32> -> vector<8x16xf32>
    %cst_86 = arith.constant dense<0.000000e+00> : vector<8x16xf32>
    %117 = tpu.matmul %116, %7, %cst_86 {dimension_numbers = #tpu.dot_dimension_numbers<[1], [0], [0], [1], [0, 0, 1, 1], [], []>} : vector<8x16xf32>, vector<16x16xf32>, vector<8x16xf32> -> vector<8x16xf32>
    %c0_87 = arith.constant 0 : index
    %c0_88 = arith.constant 0 : index
    %c7 = arith.constant 7 : index
    %c0_89 = arith.constant 0 : index
    %c0_90 = arith.constant 0 : index
    %118 = vector.load %arg5[%c0_87, %c0_88, %c7, %c0_89, %c0_90] : memref<1x8x8x2x16xf32, #tpu.memory_space<vmem>>, vector<1x8x1x1x16xf32>
    %119 = vector.shape_cast %118 : vector<1x8x1x1x16xf32> to vector<8x16xf32>
    %120 = vector.shape_cast %117 : vector<8x16xf32> to vector<1x8x1x1x16xf32>
    tpu.vector_store %arg5[%c0_87, %c0_88, %c7, %c0_89, %c0_90], %120 {strides = array<i32>} : memref<1x8x8x2x16xf32, #tpu.memory_space<vmem>>, vector<1x8x1x1x16xf32>,
    %121 = vector.extract_strided_slice %113 {offsets = [16, 0], sizes = [8, 8], strides = [1, 1]} : vector<32x8xf32> to vector<8x8xf32>
    %122 = vector.extract_strided_slice %113 {offsets = [24, 0], sizes = [8, 8], strides = [1, 1]} : vector<32x8xf32> to vector<8x8xf32>
    %123 = tpu.concatenate %121, %122 in 1 : vector<8x8xf32>, vector<8x8xf32> -> vector<8x16xf32>
    %cst_91 = arith.constant dense<0.000000e+00> : vector<8x16xf32>
    %124 = tpu.matmul %123, %7, %cst_91 {dimension_numbers = #tpu.dot_dimension_numbers<[1], [0], [0], [1], [0, 0, 1, 1], [], []>} : vector<8x16xf32>, vector<16x16xf32>, vector<8x16xf32> -> vector<8x16xf32>
    %c0_92 = arith.constant 0 : index
    %c0_93 = arith.constant 0 : index
    %c7_94 = arith.constant 7 : index
    %c1_95 = arith.constant 1 : index
    %c0_96 = arith.constant 0 : index
    %125 = vector.load %arg5[%c0_92, %c0_93, %c7_94, %c1_95, %c0_96] : memref<1x8x8x2x16xf32, #tpu.memory_space<vmem>>, vector<1x8x1x1x16xf32>
    %126 = vector.shape_cast %125 : vector<1x8x1x1x16xf32> to vector<8x16xf32>
    %127 = vector.shape_cast %124 : vector<8x16xf32> to vector<1x8x1x1x16xf32>
    tpu.vector_store %arg5[%c0_92, %c0_93, %c7_94, %c1_95, %c0_96], %127 {strides = array<i32>} : memref<1x8x8x2x16xf32, #tpu.memory_space<vmem>>, vector<1x8x1x1x16xf32>,
    return
  }
  func.func @transform_0(%arg0: i32) -> (i32, i32, i32) {
    %c0_i32 = arith.constant 0 : i32
    %c0_i32_0 = arith.constant 0 : i32
    %c0_i32_1 = arith.constant 0 : i32
    return %arg0, %c0_i32, %c0_i32_0 : i32, i32, i32
  }
  func.func @transform_1(%arg0: i32) -> (i32, i32) {
    %c0_i32 = arith.constant 0 : i32
    %c0_i32_0 = arith.constant 0 : i32
    %c0_i32_1 = arith.constant 0 : i32
    return %c0_i32, %c0_i32_0 : i32, i32
  }
  func.func @transform_2(%arg0: i32) -> (i32, i32) {
    %c0_i32 = arith.constant 0 : i32
    %c0_i32_0 = arith.constant 0 : i32
    %c0_i32_1 = arith.constant 0 : i32
    return %c0_i32, %c0_i32_0 : i32, i32
  }
  func.func @transform_3(%arg0: i32) -> (i32, i32) {
    %c0_i32 = arith.constant 0 : i32
    %c0_i32_0 = arith.constant 0 : i32
    %c0_i32_1 = arith.constant 0 : i32
    return %c0_i32, %c0_i32_0 : i32, i32
  }
  func.func @transform_4(%arg0: i32) -> (i32, i32, i32, i32, i32) {
    %c0_i32 = arith.constant 0 : i32
    %c0_i32_0 = arith.constant 0 : i32
    %c0_i32_1 = arith.constant 0 : i32
    %c0_i32_2 = arith.constant 0 : i32
    %c0_i32_3 = arith.constant 0 : i32
    return %arg0, %c0_i32, %c0_i32_0, %c0_i32_1, %c0_i32_2 : i32, i32, i32, i32, i32
  }
}

</mosaic_0001>

<llo_original>
// kernel: tpu_custom_call.1
$region0: #{tpu_custom_call.1}
  #allocation0 [shape = 'u32[]', space=smem, size = 0x4, offset = 0x4, fixed_abs, tag = 'smem constant byte address 0x4 - core index']
  #allocation1 [shape = 'u32[144,128]{1,0:T(1,128)}', space=vmem, size = 0x12000, scoped, tag = 'internal scratch']
  %s0 = inlined_call_operand.vmem [shape: f32[2,16,64], index: 0, kind: input, shape index: {}]
  %s1 = inlined_call_operand.vmem [shape: f32[32,16], index: 1, kind: input, shape index: {}]
  %s2 = inlined_call_operand.vmem [shape: f32[32,1], index: 2, kind: input, shape index: {}]
  %s3 = inlined_call_operand.vmem [shape: f32[16,16], index: 3, kind: input, shape index: {}]
  %s4 = inlined_call_operand.hbm [shape: f32[2,8,8,2,16], index: 4, kind: output, shape index: {}]
  %s5 = sld [smem:[#allocation0]]
  $region49: #{tpu_custom_call.1} parent=0
    _
  %s7 = ssub.s32 1, %s5
  %s8 = scalar_select 0, %s7, %s5
  $region1: #{tpu_custom_call.1} parent=0
    #allocation2 [shape = 'u8[131072]{0}', space=vmem, size = 0x20000, scoped, tag = 'output window, operand 0']
    #allocation3 [shape = 's32[2]{0}', space=sflag, size = 0x8, scoped, tag = 'scoped memory for tpu_custom_call.1']
    %9 = vsyncpa [#allocation3], 0
    %s10 = scalar_lea.sflag [#allocation3], 1
    %11 = vsyncpa %s10, 0
    loop: start=0, step=1, limit=4
    $region2: #{tpu_custom_call.1} parent=1 // loop_pre_header
      _
    $region3: #{tpu_custom_call.1} parent=1 // loop_header
      %s13 = sphi 0, %s17
      %p14 = scmp.ge.s32.totalorder %s13, 4
      %s23 = sphi 0, %s25
      %s26 = sphi 0, %s23
      %s27 = sphi 0, %s26
      %s43 = sphi 0, %s27
      %s47 = sphi 0, %s47
      %s49 = sphi 0, %s47
      %s50 = sphi 0, %s49
      %s64 = sphi 0, %s50
      %s68 = sphi 0, %s68
      %s70 = sphi 0, %s68
      %s71 = sphi 0, %s70
      %s85 = sphi 0, %s71
      %s89 = sphi 0, %s89
      %s91 = sphi 0, %s89
      %s92 = sphi 0, %s91
      %s106 = sphi 0, %s92
      %s112 = sphi 0, %s114
      %s115 = sphi 0, %s112
      %s116 = sphi 0, %s115
      %s132 = sphi 0, %s116
    $region4: #{tpu_custom_call.1} parent=1 // loop_header_branch
      %16 = sbr.rel (%p14) target = $region8
    $region5: #{tpu_custom_call.1} parent=1 // loop_body
      %s18 = ssub.s32 %s13, 1
      %s19 = ssub.s32 %s13, 2
      %s20 = sadd.s32 %s13, 1
      %s21 = ssub.s32 %s13, %s20
      %p22 = scmp.eq.s32.totalorder %s21, 0
      %s24 = sadd.s32 %s23, 1
      %s25 = scalar_select %p22, %s23, %s24
      %p28 = pneg %p22
      %p29 = scmp.eq.s32.totalorder %s13, 1
      %p30 = por %p28, %p29
      %p31 = scmp.ne.s32.totalorder %s23, %s26
      %p32 = scmp.eq.s32.totalorder %s13, 0
      %p33 = por %p31, %p32
      %p34 = scmp.ne.s32.totalorder %s23, %s26
      %p35 = scmp.eq.s32.totalorder %s18, 1
      %p36 = por %p34, %p35
      %p37 = scmp.ne.s32.totalorder %s26, %s27
      %p38 = scmp.eq.s32.totalorder %s18, 0
      %p39 = por %p37, %p38
      %p40 = scmp.ne.s32.totalorder %s26, %s27
      %p41 = scmp.eq.s32.totalorder %s19, 1
      %p42 = por %p40, %p41
      %p44 = scmp.ne.s32.totalorder %s27, %s43
      %p45 = scmp.eq.s32.totalorder %s19, 0
      %p46 = por %p44, %p45
      %s48 = sadd.s32 %s47, 1
      %p51 = scmp.eq.s32.totalorder %s13, 1
      %p52 = scmp.ne.s32.totalorder %s47, %s49
      %p53 = scmp.eq.s32.totalorder %s13, 0
      %p54 = por %p52, %p53
      %p55 = scmp.ne.s32.totalorder %s47, %s49
      %p56 = scmp.eq.s32.totalorder %s18, 1
      %p57 = por %p55, %p56
      %p58 = scmp.ne.s32.totalorder %s49, %s50
      %p59 = scmp.eq.s32.totalorder %s18, 0
      %p60 = por %p58, %p59
      %p61 = scmp.ne.s32.totalorder %s49, %s50
      %p62 = scmp.eq.s32.totalorder %s19, 1
      %p63 = por %p61, %p62
      %p65 = scmp.ne.s32.totalorder %s50, %s64
      %p66 = scmp.eq.s32.totalorder %s19, 0
      %p67 = por %p65, %p66
      %s69 = sadd.s32 %s68, 1
      %p72 = scmp.eq.s32.totalorder %s13, 1
      %p73 = scmp.ne.s32.totalorder %s68, %s70
      %p74 = scmp.eq.s32.totalorder %s13, 0
      %p75 = por %p73, %p74
      %p76 = scmp.ne.s32.totalorder %s68, %s70
      %p77 = scmp.eq.s32.totalorder %s18, 1
      %p78 = por %p76, %p77
      %p79 = scmp.ne.s32.totalorder %s70, %s71
      %p80 = scmp.eq.s32.totalorder %s18, 0
      %p81 = por %p79, %p80
      %p82 = scmp.ne.s32.totalorder %s70, %s71
      %p83 = scmp.eq.s32.totalorder %s19, 1
      %p84 = por %p82, %p83
      %p86 = scmp.ne.s32.totalorder %s71, %s85
      %p87 = scmp.eq.s32.totalorder %s19, 0
      %p88 = por %p86, %p87
      %s90 = sadd.s32 %s89, 1
      %p93 = scmp.eq.s32.totalorder %s13, 1
      %p94 = scmp.ne.s32.totalorder %s89, %s91
      %p95 = scmp.eq.s32.totalorder %s13, 0
      %p96 = por %p94, %p95
      %p97 = scmp.ne.s32.totalorder %s89, %s91
      %p98 = scmp.eq.s32.totalorder %s18, 1
      %p99 = por %p97, %p98
      %p100 = scmp.ne.s32.totalorder %s91, %s92
      %p101 = scmp.eq.s32.totalorder %s18, 0
      %p102 = por %p100, %p101
      %p103 = scmp.ne.s32.totalorder %s91, %s92
      %p104 = scmp.eq.s32.totalorder %s19, 1
      %p105 = por %p103, %p104
      %p107 = scmp.ne.s32.totalorder %s92, %s106
      %p108 = scmp.eq.s32.totalorder %s19, 0
      %p109 = por %p107, %p108
      %s110 = ssub.s32 %s13, %s20
      %p111 = scmp.eq.s32.totalorder %s110, 0
      %s113 = sadd.s32 %s112, 1
      %s114 = scalar_select %p111, %s112, %s113
      %p117 = pneg %p111
      %p118 = scmp.eq.s32.totalorder %s13, 1
      %p119 = por %p117, %p118
      %p120 = scmp.ne.s32.totalorder %s112, %s115
      %p121 = scmp.eq.s32.totalorder %s13, 0
      %p122 = por %p120, %p121
      %p123 = scmp.ne.s32.totalorder %s112, %s115
      %p124 = scmp.eq.s32.totalorder %s18, 1
      %p125 = por %p123, %p124
      %p126 = scmp.ne.s32.totalorder %s115, %s116
      %p127 = scmp.eq.s32.totalorder %s18, 0
      %p128 = por %p126, %p127
      %p129 = scmp.ne.s32.totalorder %s115, %s116
      %p130 = scmp.eq.s32.totalorder %s19, 1
      %p131 = por %p129, %p130
      %p133 = scmp.ne.s32.totalorder %s116, %s132
      %p134 = scmp.eq.s32.totalorder %s19, 0
      %p135 = por %p133, %p134
      %p136 = scmp.le.s32.totalorder 1, %s13
      %p137 = scmp.lt.s32.totalorder %s13, 3
      %p138 = pnand %p136, %p137
      %p139 = pneg %p138
      // Predicated region
      $region9: #{tpu_custom_call.1} parent=5 // pred_check
        _
      $region10: #{tpu_custom_call.1} parent=5 // pred_check_branch
        %141 = sbr.rel (%p138) target = $region12
      $region11: #{tpu_custom_call.1} parent=5 // pred_region
        %s142 = ssub.s32 %s13, 1
        // Predicated region
        $region13: #{tpu_custom_call.1} parent=11 // pred_check
          %p143 = pneg %p60
        $region14: #{tpu_custom_call.1} parent=11 // pred_check_branch
          %145 = sbr.rel (%p143) target = $region16
        $region15: #{tpu_custom_call.1} parent=11 // pred_region
          _
        $region16: #{tpu_custom_call.1} parent=11 // pred_fallthru
          _
        // Predicated region
        $region17: #{tpu_custom_call.1} parent=11 // pred_check
          %p146 = pneg %p81
        $region18: #{tpu_custom_call.1} parent=11 // pred_check_branch
          %148 = sbr.rel (%p146) target = $region20
        $region19: #{tpu_custom_call.1} parent=11 // pred_region
          _
        $region20: #{tpu_custom_call.1} parent=11 // pred_fallthru
          _
        // Predicated region
        $region21: #{tpu_custom_call.1} parent=11 // pred_check
          %p149 = pneg %p102
        $region22: #{tpu_custom_call.1} parent=11 // pred_check_branch
          %151 = sbr.rel (%p149) target = $region24
        $region23: #{tpu_custom_call.1} parent=11 // pred_region
          _
        $region24: #{tpu_custom_call.1} parent=11 // pred_fallthru
          _
      $region12: #{tpu_custom_call.1} parent=5 // pred_fallthru
        _
      %p152 = scmp.lt.s32.totalorder %s13, 2
      // Predicated region
      $region25: #{tpu_custom_call.1} parent=5 // pred_check
        %p153 = pneg %p152
      $region26: #{tpu_custom_call.1} parent=5 // pred_check_branch
        %155 = sbr.rel (%p153) target = $region28
      $region27: #{tpu_custom_call.1} parent=5 // pred_region
        // Predicated region
        $region29: #{tpu_custom_call.1} parent=27 // pred_check
          %p156 = pneg %p33
        $region30: #{tpu_custom_call.1} parent=27 // pred_check_branch
          %158 = sbr.rel (%p156) target = $region32
        $region31: #{tpu_custom_call.1} parent=27 // pred_region
          %p159 = scmp.lt.s32.totalorder %s13, 1
          %s160 = scalar_select %p159, %s13, 1
          %s161 = smul.addr %s160, 2
          %s162 = smul.addr %s161, 8
          %s163 = scalar_lea.vmem %s0, %s162
        $region32: #{tpu_custom_call.1} parent=27 // pred_fallthru
          _
      $region28: #{tpu_custom_call.1} parent=5 // pred_fallthru
        _
      %p164 = scmp.le.s32.totalorder 1, %s13
      %p165 = scmp.lt.s32.totalorder %s13, 3
      %p166 = pnand %p164, %p165
      %p167 = pneg %p166
      // Predicated region
      $region33: #{tpu_custom_call.1} parent=5 // pred_check
        _
      $region34: #{tpu_custom_call.1} parent=5 // pred_check_branch
        %169 = sbr.rel (%p166) target = $region36
      $region35: #{tpu_custom_call.1} parent=5 // pred_region
        %s170 = ssub.s32 %s13, 1
        %p171 = scmp.lt.s32.totalorder %s18, 1
        %s172 = scalar_select %p171, %s18, 1
        %s173 = smul.addr %s172, 2
        %s174 = smul.addr %s173, 8
        %s175 = scalar_lea.vmem %s0, %s174
        %p176 = pneg %p39
        %p177 = pneg %p36
        %p178 = pneg %p60
        %p179 = pneg %p57
        %p180 = pneg %p81
        %p181 = pneg %p78
        %p182 = pneg %p102
        %p183 = pneg %p99
        %p184 = pneg %p128
        %p185 = pneg %p125
        %s186 = sand.u32 %s115, 1
        %s187 = scalar_lea.sflag [#allocation3], %s186
        %s188 = sand.u32 %s115, 1
        %s189 = smul.addr %s188, 128
        %s190 = scalar_lea.vmem [#allocation2], %s189
        %p191 = scmp.lt.s32.totalorder %s18, 1
        %s192 = scalar_select %p191, %s18, 1
        %s193 = smul.addr %s192, 2
        %s194 = smul.addr %s193, 8
        %s195 = scalar_lea.vmem %s0, %s194
        %v196 = vld [vmem:[%s1] sm:$0xff]
        %v197 = vld [vmem:[%s1 + $0x8] sm:$0xff]
        %v198 = vld [vmem:[%s1 + $0x10] sm:$0xff]
        %v199 = vld [vmem:[%s1 + $0x18] sm:$0xff]
        %v200 = vld [vmem:[%s195] sm:$0xff]
        %v201 = vld [vmem:[%s195 + $0x8] sm:$0xff]
        %v202 = vld [vmem:[%s2] sm:$0xff]
        %v203 = vld [vmem:[%s2 + $0x8] sm:$0xff]
        %v204 = vld [vmem:[%s2 + $0x10] sm:$0xff]
        %v205 = vld [vmem:[%s2 + $0x18] sm:$0xff]
        %207 = vset.pattern.permute.xlu0 0
        %208 = vperm.xlu0 %207, %v202
        %v209 = vpop.permute.xlu0 %208
        %212 = vset.pattern.permute.xlu0 0
        %213 = vperm.xlu0 %212, %v203
        %v214 = vpop.permute.xlu0 %213
        %217 = vset.pattern.permute.xlu0 0
        %218 = vperm.xlu0 %217, %v204
        %v219 = vpop.permute.xlu0 %218
        %222 = vset.pattern.permute.xlu0 0
        %223 = vperm.xlu0 %222, %v205
        %v224 = vpop.permute.xlu0 %223
        %vm226 = vcmask 130048
        %v228 = vsel %vm226, %v196, 0
        %v231 = vsel %vm226, %v197, 0
        %v234 = vsel %vm226, %v198, 0
        %v237 = vsel %vm226, %v199, 0
        %239 = vmatprep.subr.mxu0 0.0
        %240 = vmatpush1.msra.mxu0 %v200
        %241 = vmatprep.subr.mxu0 0.0
        %242 = vmatpush1.msra.mxu0 %v201
        %243 = vmatprep.subr.mxu0 0.0
        %244 = vmatpush1.msra.mxu0 0.0
        %245 = vmatprep.subr.mxu0 0.0
        %246 = vmatpush1.msra.mxu0 0.0
        %247 = vmatprep.subr.mxu0 0.0
        %248 = vmatpush1.msra.mxu0 0.0
        %249 = vmatprep.subr.mxu0 0.0
        %250 = vmatpush1.msra.mxu0 0.0
        %251 = vmatprep.subr.mxu0 0.0
        %252 = vmatpush1.msra.mxu0 0.0
        %253 = vmatprep.subr.mxu0 0.0
        %254 = vmatpush1.msra.mxu0 0.0
        %255 = vmatprep.subr.mxu0 0.0
        %256 = vmatpush1.msra.mxu0 0.0
        %257 = vmatprep.subr.mxu0 0.0
        %258 = vmatpush1.msra.mxu0 0.0
        %259 = vmatprep.subr.mxu0 0.0
        %260 = vmatpush1.msra.mxu0 0.0
        %261 = vmatprep.subr.mxu0 0.0
        %262 = vmatpush1.msra.mxu0 0.0
        %263 = vmatprep.subr.mxu0 0.0
        %264 = vmatpush1.msra.mxu0 0.0
        %265 = vmatprep.subr.mxu0 0.0
        %266 = vmatpush1.msra.mxu0 0.0
        %267 = vmatprep.subr.mxu0 0.0
        %268 = vmatpush1.msra.mxu0 0.0
        %269 = vmatprep.subr.mxu0 0.0
        %270 = vmatpush1.msra.mxu0 0.0
        %271 = vmatprep.subr.mxu0 0.0
        %272 = vmatpush1.msra.mxu0 0.0
        %273 = vmatprep.subr.mxu0 0.0
        %274 = vmatpush1.msra.mxu0 0.0
        %275 = vmatprep.subr.mxu0 0.0
        %276 = vmatpush1.msra.mxu0 0.0
        %277 = vmatprep.subr.mxu0 0.0
        %278 = vmatpush1.msra.mxu0 0.0
        %279 = vmatprep.subr.mxu0 0.0
        %280 = vmatpush1.msra.mxu0 0.0
        %281 = vmatprep.subr.mxu0 0.0
        %282 = vmatpush1.msra.mxu0 0.0
        %283 = vmatprep.subr.mxu0 0.0
        %284 = vmatpush1.msra.mxu0 0.0
        %285 = vmatprep.subr.mxu0 0.0
        %286 = vmatpush1.msra.mxu0 0.0
        %287 = vmatprep.subr.mxu0 0.0
        %288 = vmatpush1.msra.mxu0 0.0
        %289 = vmatprep.subr.mxu0 0.0
        %290 = vmatpush1.msra.mxu0 0.0
        %291 = vmatprep.subr.mxu0 0.0
        %292 = vmatpush1.msra.mxu0 0.0
        %293 = vmatprep.subr.mxu0 0.0
        %294 = vmatpush1.msra.mxu0 0.0
        %295 = vmatprep.subr.mxu0 0.0
        %296 = vmatpush1.msra.mxu0 0.0
        %297 = vmatprep.subr.mxu0 0.0
        %298 = vmatpush1.msra.mxu0 0.0
        %299 = vmatprep.subr.mxu0 0.0
        %300 = vmatpush1.msra.mxu0 0.0
        %301 = vmatprep.subr.mxu0 0.0
        %302 = vmatpush1.msra.mxu0 0.0
        %303 = vmatprep.mubr.f32.mxu0 0.0
        %304 = vmatmul.mubr.f32.gmra.mrb[0].mxu0 %v228
        %v305 = vpop.f32.mrb[0].mxu0
        %v306 = vadd.f32 %v209, %v305
        %v307 = vpop.f32.mrb[0].mxu0
        %308 = vmatprep.mubr.f32.mxu0 0.0
        %309 = vmatmul.mubr.f32.gmra.mrb[0].mxu0 %v231
        %v310 = vpop.f32.mrb[0].mxu0
        %v311 = vadd.f32 %v214, %v310
        %v312 = vpop.f32.mrb[0].mxu0
        %313 = vmatprep.mubr.f32.mxu0 0.0
        %314 = vmatmul.mubr.f32.gmra.mrb[0].mxu0 %v234
        %v315 = vpop.f32.mrb[0].mxu0
        %v316 = vadd.f32 %v219, %v315
        %v317 = vpop.f32.mrb[0].mxu0
        %318 = vmatprep.mubr.f32.mxu0 0.0
        %319 = vmatmul.mubr.f32.gmra.mrb[0].mxu0 %v237
        %v320 = vpop.f32.mrb[0].mxu0
        %v321 = vadd.f32 %v224, %v320
        %v322 = vpop.f32.mrb[0].mxu0
        %323 = vdwg.mxu0
        %v324 = vld [vmem:[%s3] sm:$0xff]
        %v325 = vld [vmem:[%s3 + $0x8] sm:$0xff]
        %327 = vrot.lane.b32.xlu0 %v311, 8
        %v328 = vpop.permute.xlu0 %327
        %vm330 = vcmask 64512
        %v331 = vsel %vm330, %v306, %v328
        %v333 = vsel %vm226, %v331, 0
        %335 = vmatprep.subr.mxu0 0.0
        %336 = vmatpush1.msra.mxu0 %v324
        %337 = vmatprep.subr.mxu0 0.0
        %338 = vmatpush1.msra.mxu0 %v325
        %339 = vmatprep.subr.mxu0 0.0
        %340 = vmatpush1.msra.mxu0 0.0
        %341 = vmatprep.subr.mxu0 0.0
        %342 = vmatpush1.msra.mxu0 0.0
        %343 = vmatprep.subr.mxu0 0.0
        %344 = vmatpush1.msra.mxu0 0.0
        %345 = vmatprep.subr.mxu0 0.0
        %346 = vmatpush1.msra.mxu0 0.0
        %347 = vmatprep.subr.mxu0 0.0
        %348 = vmatpush1.msra.mxu0 0.0
        %349 = vmatprep.subr.mxu0 0.0
        %350 = vmatpush1.msra.mxu0 0.0
        %351 = vmatprep.subr.mxu0 0.0
        %352 = vmatpush1.msra.mxu0 0.0
        %353 = vmatprep.subr.mxu0 0.0
        %354 = vmatpush1.msra.mxu0 0.0
        %355 = vmatprep.subr.mxu0 0.0
        %356 = vmatpush1.msra.mxu0 0.0
        %357 = vmatprep.subr.mxu0 0.0
        %358 = vmatpush1.msra.mxu0 0.0
        %359 = vmatprep.subr.mxu0 0.0
        %360 = vmatpush1.msra.mxu0 0.0
        %361 = vmatprep.subr.mxu0 0.0
        %362 = vmatpush1.msra.mxu0 0.0
        %363 = vmatprep.subr.mxu0 0.0
        %364 = vmatpush1.msra.mxu0 0.0
        %365 = vmatprep.subr.mxu0 0.0
        %366 = vmatpush1.msra.mxu0 0.0
        %367 = vmatprep.subr.mxu0 0.0
        %368 = vmatpush1.msra.mxu0 0.0
        %369 = vmatprep.subr.mxu0 0.0
        %370 = vmatpush1.msra.mxu0 0.0
        %371 = vmatprep.subr.mxu0 0.0
        %372 = vmatpush1.msra.mxu0 0.0
        %373 = vmatprep.subr.mxu0 0.0
        %374 = vmatpush1.msra.mxu0 0.0
        %375 = vmatprep.subr.mxu0 0.0
        %376 = vmatpush1.msra.mxu0 0.0
        %377 = vmatprep.subr.mxu0 0.0
        %378 = vmatpush1.msra.mxu0 0.0
        %379 = vmatprep.subr.mxu0 0.0
        %380 = vmatpush1.msra.mxu0 0.0
        %381 = vmatprep.subr.mxu0 0.0
        %382 = vmatpush1.msra.mxu0 0.0
        %383 = vmatprep.subr.mxu0 0.0
        %384 = vmatpush1.msra.mxu0 0.0
        %385 = vmatprep.subr.mxu0 0.0
        %386 = vmatpush1.msra.mxu0 0.0
        %387 = vmatprep.subr.mxu0 0.0
        %388 = vmatpush1.msra.mxu0 0.0
        %389 = vmatprep.subr.mxu0 0.0
        %390 = vmatpush1.msra.mxu0 0.0
        %391 = vmatprep.subr.mxu0 0.0
        %392 = vmatpush1.msra.mxu0 0.0
        %393 = vmatprep.subr.mxu0 0.0
        %394 = vmatpush1.msra.mxu0 0.0
        %395 = vmatprep.subr.mxu0 0.0
        %396 = vmatpush1.msra.mxu0 0.0
        %397 = vmatprep.subr.mxu0 0.0
        %398 = vmatpush1.msra.mxu0 0.0
        %399 = vmatprep.mubr.f32.mxu0 0.0
        %400 = vmatmul.mubr.f32.gmra.mrb[0].mxu0 %v333
        %v401 = vpop.f32.mrb[0].mxu0
        %v402 = vadd.f32 0.0, %v401
        %v403 = vpop.f32.mrb[0].mxu0
        %404 = vdwg.mxu0
        %v406 = vcombine.high %v402, %v402
        %v408 = vunpack.c.l.s4 1966171168
        %v409 = vunpack.c.0.s8 %v408
        %v410 = vlaneseq
        %v411 = vshrl.u32 %v410, 7
        %v412 = vsub.s32 %v409, %v411
        %v413 = vrot.slane %v402, %v412
        %v415 = vunpack.c.l.s4 1966171168
        %v416 = vunpack.c.0.s8 %v415
        %v417 = vlaneseq
        %v418 = vshrl.u32 %v417, 7
        %v419 = vsub.s32 %v416, %v418
        %v420 = vrot.slane %v406, %v419
        %v421 = vcombine.high %v413, %v413
        %v422 = vcombine.high %v420, %v420
        %v424 = vunpack.c.l.s4 1966171168
        %v425 = vunpack.c.0.s8 %v424
        %v426 = vlaneseq
        %v427 = vshrl.u32 %v426, 7
        %v428 = vsub.s32 %v425, %v427
        %v429 = vrot.slane %v413, %v428
        %v431 = vunpack.c.l.s4 1966171168
        %v432 = vunpack.c.0.s8 %v431
        %v433 = vlaneseq
        %v434 = vshrl.u32 %v433, 7
        %v435 = vsub.s32 %v432, %v434
        %v436 = vrot.slane %v420, %v435
        %v438 = vunpack.c.l.s4 1966171168
        %v439 = vunpack.c.0.s8 %v438
        %v440 = vlaneseq
        %v441 = vshrl.u32 %v440, 7
        %v442 = vsub.s32 %v439, %v441
        %v443 = vrot.slane %v421, %v442
        %v445 = vunpack.c.l.s4 1966171168
        %v446 = vunpack.c.0.s8 %v445
        %v447 = vlaneseq
        %v448 = vshrl.u32 %v447, 7
        %v449 = vsub.s32 %v446, %v448
        %v450 = vrot.slane %v422, %v449
        %v451 = vcombine.high %v429, %v429
        %v452 = vcombine.high %v436, %v436
        %v453 = vcombine.high %v443, %v443
        %v454 = vcombine.high %v450, %v450
        %vm463 = vcmask 122880
        %464 = vst.msk [vmem:[%s190] sm:$0x1] %vm463, %v429
        %465 = vst.msk [vmem:[%s190 + $0x10] sm:$0x1] %vm463, %v443
        %466 = vst.msk [vmem:[%s190 + $0x20] sm:$0x1] %vm463, %v451
        %467 = vst.msk [vmem:[%s190 + $0x30] sm:$0x1] %vm463, %v453
        %468 = vst.msk [vmem:[%s190 + $0x40] sm:$0x1] %vm463, %v436
        %469 = vst.msk [vmem:[%s190 + $0x50] sm:$0x1] %vm463, %v450
        %470 = vst.msk [vmem:[%s190 + $0x60] sm:$0x1] %vm463, %v452
        %471 = vst.msk [vmem:[%s190 + $0x70] sm:$0x1] %vm463, %v454
        %473 = vrot.lane.b32.xlu0 %v321, 8
        %v474 = vpop.permute.xlu0 %473
        %v476 = vsel %vm330, %v316, %v474
        %v478 = vsel %vm226, %v476, 0
        %480 = vmatprep.subr.mxu0 0.0
        %481 = vmatpush1.msra.mxu0 %v324
        %482 = vmatprep.subr.mxu0 0.0
        %483 = vmatpush1.msra.mxu0 %v325
        %484 = vmatprep.subr.mxu0 0.0
        %485 = vmatpush1.msra.mxu0 0.0
        %486 = vmatprep.subr.mxu0 0.0
        %487 = vmatpush1.msra.mxu0 0.0
        %488 = vmatprep.subr.mxu0 0.0
        %489 = vmatpush1.msra.mxu0 0.0
        %490 = vmatprep.subr.mxu0 0.0
        %491 = vmatpush1.msra.mxu0 0.0
        %492 = vmatprep.subr.mxu0 0.0
        %493 = vmatpush1.msra.mxu0 0.0
        %494 = vmatprep.subr.mxu0 0.0
        %495 = vmatpush1.msra.mxu0 0.0
        %496 = vmatprep.subr.mxu0 0.0
        %497 = vmatpush1.msra.mxu0 0.0
        %498 = vmatprep.subr.mxu0 0.0
        %499 = vmatpush1.msra.mxu0 0.0
        %500 = vmatprep.subr.mxu0 0.0
        %501 = vmatpush1.msra.mxu0 0.0
        %502 = vmatprep.subr.mxu0 0.0
        %503 = vmatpush1.msra.mxu0 0.0
        %504 = vmatprep.subr.mxu0 0.0
        %505 = vmatpush1.msra.mxu0 0.0
        %506 = vmatprep.subr.mxu0 0.0
        %507 = vmatpush1.msra.mxu0 0.0
        %508 = vmatprep.subr.mxu0 0.0
        %509 = vmatpush1.msra.mxu0 0.0
        %510 = vmatprep.subr.mxu0 0.0
        %511 = vmatpush1.msra.mxu0 0.0
        %512 = vmatprep.subr.mxu0 0.0
        %513 = vmatpush1.msra.mxu0 0.0
        %514 = vmatprep.subr.mxu0 0.0
        %515 = vmatpush1.msra.mxu0 0.0
        %516 = vmatprep.subr.mxu0 0.0
        %517 = vmatpush1.msra.mxu0 0.0
        %518 = vmatprep.subr.mxu0 0.0
        %519 = vmatpush1.msra.mxu0 0.0
        %520 = vmatprep.subr.mxu0 0.0
        %521 = vmatpush1.msra.mxu0 0.0
        %522 = vmatprep.subr.mxu0 0.0
        %523 = vmatpush1.msra.mxu0 0.0
        %524 = vmatprep.subr.mxu0 0.0
        %525 = vmatpush1.msra.mxu0 0.0
        %526 = vmatprep.subr.mxu0 0.0
        %527 = vmatpush1.msra.mxu0 0.0
        %528 = vmatprep.subr.mxu0 0.0
        %529 = vmatpush1.msra.mxu0 0.0
        %530 = vmatprep.subr.mxu0 0.0
        %531 = vmatpush1.msra.mxu0 0.0
        %532 = vmatprep.subr.mxu0 0.0
        %533 = vmatpush1.msra.mxu0 0.0
        %534 = vmatprep.subr.mxu0 0.0
        %535 = vmatpush1.msra.mxu0 0.0
        %536 = vmatprep.subr.mxu0 0.0
        %537 = vmatpush1.msra.mxu0 0.0
        %538 = vmatprep.subr.mxu0 0.0
        %539 = vmatpush1.msra.mxu0 0.0
        %540 = vmatprep.subr.mxu0 0.0
        %541 = vmatpush1.msra.mxu0 0.0
        %542 = vmatprep.subr.mxu0 0.0
        %543 = vmatpush1.msra.mxu0 0.0
        %544 = vmatprep.mubr.f32.mxu0 0.0
        %545 = vmatmul.mubr.f32.gmra.mrb[0].mxu0 %v478
        %v546 = vpop.f32.mrb[0].mxu0
        %v547 = vadd.f32 0.0, %v546
        %v548 = vpop.f32.mrb[0].mxu0
        %549 = vdwg.mxu0
        %v551 = vcombine.high %v547, %v547
        %v553 = vunpack.c.l.s4 1966171168
        %v554 = vunpack.c.0.s8 %v553
        %v555 = vlaneseq
        %v556 = vshrl.u32 %v555, 7
        %v557 = vsub.s32 %v554, %v556
        %v558 = vrot.slane %v547, %v557
        %v560 = vunpack.c.l.s4 1966171168
        %v561 = vunpack.c.0.s8 %v560
        %v562 = vlaneseq
        %v563 = vshrl.u32 %v562, 7
        %v564 = vsub.s32 %v561, %v563
        %v565 = vrot.slane %v551, %v564
        %v566 = vcombine.high %v558, %v558
        %v567 = vcombine.high %v565, %v565
        %v569 = vunpack.c.l.s4 1966171168
        %v570 = vunpack.c.0.s8 %v569
        %v571 = vlaneseq
        %v572 = vshrl.u32 %v571, 7
        %v573 = vsub.s32 %v570, %v572
        %v574 = vrot.slane %v558, %v573
        %v576 = vunpack.c.l.s4 1966171168
        %v577 = vunpack.c.0.s8 %v576
        %v578 = vlaneseq
        %v579 = vshrl.u32 %v578, 7
        %v580 = vsub.s32 %v577, %v579
        %v581 = vrot.slane %v565, %v580
        %v583 = vunpack.c.l.s4 1966171168
        %v584 = vunpack.c.0.s8 %v583
        %v585 = vlaneseq
        %v586 = vshrl.u32 %v585, 7
        %v587 = vsub.s32 %v584, %v586
        %v588 = vrot.slane %v566, %v587
        %v590 = vunpack.c.l.s4 1966171168
        %v591 = vunpack.c.0.s8 %v590
        %v592 = vlaneseq
        %v593 = vshrl.u32 %v592, 7
        %v594 = vsub.s32 %v591, %v593
        %v595 = vrot.slane %v567, %v594
        %v596 = vcombine.high %v574, %v574
        %v597 = vcombine.high %v581, %v581
        %v598 = vcombine.high %v588, %v588
        %v599 = vcombine.high %v595, %v595
        %608 = vst.msk [vmem:[%s190 + $0x1] sm:$0x1] %vm463, %v574
        %609 = vst.msk [vmem:[%s190 + $0x11] sm:$0x1] %vm463, %v588
        %610 = vst.msk [vmem:[%s190 + $0x21] sm:$0x1] %vm463, %v596
        %611 = vst.msk [vmem:[%s190 + $0x31] sm:$0x1] %vm463, %v598
        %612 = vst.msk [vmem:[%s190 + $0x41] sm:$0x1] %vm463, %v581
        %613 = vst.msk [vmem:[%s190 + $0x51] sm:$0x1] %vm463, %v595
        %614 = vst.msk [vmem:[%s190 + $0x61] sm:$0x1] %vm463, %v597
        %615 = vst.msk [vmem:[%s190 + $0x71] sm:$0x1] %vm463, %v599
        %617 = vrot.lane.b32.xlu0 %v306, 120
        %v618 = vpop.permute.xlu0 %617
        %v620 = vsel %vm330, %v618, %v311
        %v622 = vsel %vm226, %v620, 0
        %624 = vmatprep.subr.mxu0 0.0
        %625 = vmatpush1.msra.mxu0 %v324
        %626 = vmatprep.subr.mxu0 0.0
        %627 = vmatpush1.msra.mxu0 %v325
        %628 = vmatprep.subr.mxu0 0.0
        %629 = vmatpush1.msra.mxu0 0.0
        %630 = vmatprep.subr.mxu0 0.0
        %631 = vmatpush1.msra.mxu0 0.0
        %632 = vmatprep.subr.mxu0 0.0
        %633 = vmatpush1.msra.mxu0 0.0
        %634 = vmatprep.subr.mxu0 0.0
        %635 = vmatpush1.msra.mxu0 0.0
        %636 = vmatprep.subr.mxu0 0.0
        %637 = vmatpush1.msra.mxu0 0.0
        %638 = vmatprep.subr.mxu0 0.0
        %639 = vmatpush1.msra.mxu0 0.0
        %640 = vmatprep.subr.mxu0 0.0
        %641 = vmatpush1.msra.mxu0 0.0
        %642 = vmatprep.subr.mxu0 0.0
        %643 = vmatpush1.msra.mxu0 0.0
        %644 = vmatprep.subr.mxu0 0.0
        %645 = vmatpush1.msra.mxu0 0.0
        %646 = vmatprep.subr.mxu0 0.0
        %647 = vmatpush1.msra.mxu0 0.0
        %648 = vmatprep.subr.mxu0 0.0
        %649 = vmatpush1.msra.mxu0 0.0
        %650 = vmatprep.subr.mxu0 0.0
        %651 = vmatpush1.msra.mxu0 0.0
        %652 = vmatprep.subr.mxu0 0.0
        %653 = vmatpush1.msra.mxu0 0.0
        %654 = vmatprep.subr.mxu0 0.0
        %655 = vmatpush1.msra.mxu0 0.0
        %656 = vmatprep.subr.mxu0 0.0
        %657 = vmatpush1.msra.mxu0 0.0
        %658 = vmatprep.subr.mxu0 0.0
        %659 = vmatpush1.msra.mxu0 0.0
        %660 = vmatprep.subr.mxu0 0.0
        %661 = vmatpush1.msra.mxu0 0.0
        %662 = vmatprep.subr.mxu0 0.0
        %663 = vmatpush1.msra.mxu0 0.0
        %664 = vmatprep.subr.mxu0 0.0
        %665 = vmatpush1.msra.mxu0 0.0
        %666 = vmatprep.subr.mxu0 0.0
        %667 = vmatpush1.msra.mxu0 0.0
        %668 = vmatprep.subr.mxu0 0.0
        %669 = vmatpush1.msra.mxu0 0.0
        %670 = vmatprep.subr.mxu0 0.0
        %671 = vmatpush1.msra.mxu0 0.0
        %672 = vmatprep.subr.mxu0 0.0
        %673 = vmatpush1.msra.mxu0 0.0
        %674 = vmatprep.subr.mxu0 0.0
        %675 = vmatpush1.msra.mxu0 0.0
        %676 = vmatprep.subr.mxu0 0.0
        %677 = vmatpush1.msra.mxu0 0.0
        %678 = vmatprep.subr.mxu0 0.0
        %679 = vmatpush1.msra.mxu0 0.0
        %680 = vmatprep.subr.mxu0 0.0
        %681 = vmatpush1.msra.mxu0 0.0
        %682 = vmatprep.subr.mxu0 0.0
        %683 = vmatpush1.msra.mxu0 0.0
        %684 = vmatprep.subr.mxu0 0.0
        %685 = vmatpush1.msra.mxu0 0.0
        %686 = vmatprep.subr.mxu0 0.0
        %687 = vmatpush1.msra.mxu0 0.0
        %688 = vmatprep.mubr.f32.mxu0 0.0
        %689 = vmatmul.mubr.f32.gmra.mrb[0].mxu0 %v622
        %v690 = vpop.f32.mrb[0].mxu0
        %v691 = vadd.f32 0.0, %v690
        %v692 = vpop.f32.mrb[0].mxu0
        %693 = vdwg.mxu0
        %v695 = vcombine.high %v691, %v691
        %v697 = vunpack.c.l.s4 1966171168
        %v698 = vunpack.c.0.s8 %v697
        %v699 = vlaneseq
        %v700 = vshrl.u32 %v699, 7
        %v701 = vsub.s32 %v698, %v700
        %v702 = vrot.slane %v691, %v701
        %v704 = vunpack.c.l.s4 1966171168
        %v705 = vunpack.c.0.s8 %v704
        %v706 = vlaneseq
        %v707 = vshrl.u32 %v706, 7
        %v708 = vsub.s32 %v705, %v707
        %v709 = vrot.slane %v695, %v708
        %v710 = vcombine.high %v702, %v702
        %v711 = vcombine.high %v709, %v709
        %v713 = vunpack.c.l.s4 1966171168
        %v714 = vunpack.c.0.s8 %v713
        %v715 = vlaneseq
        %v716 = vshrl.u32 %v715, 7
        %v717 = vsub.s32 %v714, %v716
        %v718 = vrot.slane %v702, %v717
        %v720 = vunpack.c.l.s4 1966171168
        %v721 = vunpack.c.0.s8 %v720
        %v722 = vlaneseq
        %v723 = vshrl.u32 %v722, 7
        %v724 = vsub.s32 %v721, %v723
        %v725 = vrot.slane %v709, %v724
        %v727 = vunpack.c.l.s4 1966171168
        %v728 = vunpack.c.0.s8 %v727
        %v729 = vlaneseq
        %v730 = vshrl.u32 %v729, 7
        %v731 = vsub.s32 %v728, %v730
        %v732 = vrot.slane %v710, %v731
        %v734 = vunpack.c.l.s4 1966171168
        %v735 = vunpack.c.0.s8 %v734
        %v736 = vlaneseq
        %v737 = vshrl.u32 %v736, 7
        %v738 = vsub.s32 %v735, %v737
        %v739 = vrot.slane %v711, %v738
        %v740 = vcombine.high %v718, %v718
        %v741 = vcombine.high %v725, %v725
        %v742 = vcombine.high %v732, %v732
        %v743 = vcombine.high %v739, %v739
        %s752 = scalar_lea.vmem %s190, 2 [#allocation2]
        %753 = vst.msk [vmem:[%s752] sm:$0x1] %vm463, %v718
        %754 = vst.msk [vmem:[%s752 + $0x10] sm:$0x1] %vm463, %v732
        %755 = vst.msk [vmem:[%s752 + $0x20] sm:$0x1] %vm463, %v740
        %756 = vst.msk [vmem:[%s752 + $0x30] sm:$0x1] %vm463, %v742
        %757 = vst.msk [vmem:[%s752 + $0x40] sm:$0x1] %vm463, %v725
        %758 = vst.msk [vmem:[%s752 + $0x50] sm:$0x1] %vm463, %v739
        %759 = vst.msk [vmem:[%s752 + $0x60] sm:$0x1] %vm463, %v741
        %760 = vst.msk [vmem:[%s752 + $0x70] sm:$0x1] %vm463, %v743
        %762 = vrot.lane.b32.xlu0 %v316, 120
        %v763 = vpop.permute.xlu0 %762
        %v765 = vsel %vm330, %v763, %v321
        %v767 = vsel %vm226, %v765, 0
        %769 = vmatprep.subr.mxu0 0.0
        %770 = vmatpush1.msra.mxu0 %v324
        %771 = vmatprep.subr.mxu0 0.0
        %772 = vmatpush1.msra.mxu0 %v325
        %773 = vmatprep.subr.mxu0 0.0
        %774 = vmatpush1.msra.mxu0 0.0
        %775 = vmatprep.subr.mxu0 0.0
        %776 = vmatpush1.msra.mxu0 0.0
        %777 = vmatprep.subr.mxu0 0.0
        %778 = vmatpush1.msra.mxu0 0.0
        %779 = vmatprep.subr.mxu0 0.0
        %780 = vmatpush1.msra.mxu0 0.0
        %781 = vmatprep.subr.mxu0 0.0
        %782 = vmatpush1.msra.mxu0 0.0
        %783 = vmatprep.subr.mxu0 0.0
        %784 = vmatpush1.msra.mxu0 0.0
        %785 = vmatprep.subr.mxu0 0.0
        %786 = vmatpush1.msra.mxu0 0.0
        %787 = vmatprep.subr.mxu0 0.0
        %788 = vmatpush1.msra.mxu0 0.0
        %789 = vmatprep.subr.mxu0 0.0
        %790 = vmatpush1.msra.mxu0 0.0
        %791 = vmatprep.subr.mxu0 0.0
        %792 = vmatpush1.msra.mxu0 0.0
        %793 = vmatprep.subr.mxu0 0.0
        %794 = vmatpush1.msra.mxu0 0.0
        %795 = vmatprep.subr.mxu0 0.0
        %796 = vmatpush1.msra.mxu0 0.0
        %797 = vmatprep.subr.mxu0 0.0
        %798 = vmatpush1.msra.mxu0 0.0
        %799 = vmatprep.subr.mxu0 0.0
        %800 = vmatpush1.msra.mxu0 0.0
        %801 = vmatprep.subr.mxu0 0.0
        %802 = vmatpush1.msra.mxu0 0.0
        %803 = vmatprep.subr.mxu0 0.0
        %804 = vmatpush1.msra.mxu0 0.0
        %805 = vmatprep.subr.mxu0 0.0
        %806 = vmatpush1.msra.mxu0 0.0
        %807 = vmatprep.subr.mxu0 0.0
        %808 = vmatpush1.msra.mxu0 0.0
        %809 = vmatprep.subr.mxu0 0.0
        %810 = vmatpush1.msra.mxu0 0.0
        %811 = vmatprep.subr.mxu0 0.0
        %812 = vmatpush1.msra.mxu0 0.0
        %813 = vmatprep.subr.mxu0 0.0
        %814 = vmatpush1.msra.mxu0 0.0
        %815 = vmatprep.subr.mxu0 0.0
        %816 = vmatpush1.msra.mxu0 0.0
        %817 = vmatprep.subr.mxu0 0.0
        %818 = vmatpush1.msra.mxu0 0.0
        %819 = vmatprep.subr.mxu0 0.0
        %820 = vmatpush1.msra.mxu0 0.0
        %821 = vmatprep.subr.mxu0 0.0
        %822 = vmatpush1.msra.mxu0 0.0
        %823 = vmatprep.subr.mxu0 0.0
        %824 = vmatpush1.msra.mxu0 0.0
        %825 = vmatprep.subr.mxu0 0.0
        %826 = vmatpush1.msra.mxu0 0.0
        %827 = vmatprep.subr.mxu0 0.0
        %828 = vmatpush1.msra.mxu0 0.0
        %829 = vmatprep.subr.mxu0 0.0
        %830 = vmatpush1.msra.mxu0 0.0
        %831 = vmatprep.subr.mxu0 0.0
        %832 = vmatpush1.msra.mxu0 0.0
        %833 = vmatprep.mubr.f32.mxu0 0.0
        %834 = vmatmul.mubr.f32.gmra.mrb[0].mxu0 %v767
        %v835 = vpop.f32.mrb[0].mxu0
        %v836 = vadd.f32 0.0, %v835
        %v837 = vpop.f32.mrb[0].mxu0
        %838 = vdwg.mxu0
        %v840 = vcombine.high %v836, %v836
        %v842 = vunpack.c.l.s4 1966171168
        %v843 = vunpack.c.0.s8 %v842
        %v844 = vlaneseq
        %v845 = vshrl.u32 %v844, 7
        %v846 = vsub.s32 %v843, %v845
        %v847 = vrot.slane %v836, %v846
        %v849 = vunpack.c.l.s4 1966171168
        %v850 = vunpack.c.0.s8 %v849
        %v851 = vlaneseq
        %v852 = vshrl.u32 %v851, 7
        %v853 = vsub.s32 %v850, %v852
        %v854 = vrot.slane %v840, %v853
        %v855 = vcombine.high %v847, %v847
        %v856 = vcombine.high %v854, %v854
        %v858 = vunpack.c.l.s4 1966171168
        %v859 = vunpack.c.0.s8 %v858
        %v860 = vlaneseq
        %v861 = vshrl.u32 %v860, 7
        %v862 = vsub.s32 %v859, %v861
        %v863 = vrot.slane %v847, %v862
        %v865 = vunpack.c.l.s4 1966171168
        %v866 = vunpack.c.0.s8 %v865
        %v867 = vlaneseq
        %v868 = vshrl.u32 %v867, 7
        %v869 = vsub.s32 %v866, %v868
        %v870 = vrot.slane %v854, %v869
        %v872 = vunpack.c.l.s4 1966171168
        %v873 = vunpack.c.0.s8 %v872
        %v874 = vlaneseq
        %v875 = vshrl.u32 %v874, 7
        %v876 = vsub.s32 %v873, %v875
        %v877 = vrot.slane %v855, %v876
        %v879 = vunpack.c.l.s4 1966171168
        %v880 = vunpack.c.0.s8 %v879
        %v881 = vlaneseq
        %v882 = vshrl.u32 %v881, 7
        %v883 = vsub.s32 %v880, %v882
        %v884 = vrot.slane %v856, %v883
        %v885 = vcombine.high %v863, %v863
        %v886 = vcombine.high %v870, %v870
        %v887 = vcombine.high %v877, %v877
        %v888 = vcombine.high %v884, %v884
        %897 = vst.msk [vmem:[%s752 + $0x1] sm:$0x1] %vm463, %v863
        %898 = vst.msk [vmem:[%s752 + $0x11] sm:$0x1] %vm463, %v877
        %899 = vst.msk [vmem:[%s752 + $0x21] sm:$0x1] %vm463, %v885
        %900 = vst.msk [vmem:[%s752 + $0x31] sm:$0x1] %vm463, %v887
        %901 = vst.msk [vmem:[%s752 + $0x41] sm:$0x1] %vm463, %v870
        %902 = vst.msk [vmem:[%s752 + $0x51] sm:$0x1] %vm463, %v884
        %903 = vst.msk [vmem:[%s752 + $0x61] sm:$0x1] %vm463, %v886
        %904 = vst.msk [vmem:[%s752 + $0x71] sm:$0x1] %vm463, %v888
        %905 = vrot.lane.b32.xlu0 %v306, 112
        %v906 = vpop.permute.xlu0 %905
        %908 = vrot.lane.b32.xlu0 %v311, 120
        %v909 = vpop.permute.xlu0 %908
        %v911 = vsel %vm330, %v906, %v909
        %v913 = vsel %vm226, %v911, 0
        %915 = vmatprep.subr.mxu0 0.0
        %916 = vmatpush1.msra.mxu0 %v324
        %917 = vmatprep.subr.mxu0 0.0
        %918 = vmatpush1.msra.mxu0 %v325
        %919 = vmatprep.subr.mxu0 0.0
        %920 = vmatpush1.msra.mxu0 0.0
        %921 = vmatprep.subr.mxu0 0.0
        %922 = vmatpush1.msra.mxu0 0.0
        %923 = vmatprep.subr.mxu0 0.0
        %924 = vmatpush1.msra.mxu0 0.0
        %925 = vmatprep.subr.mxu0 0.0
        %926 = vmatpush1.msra.mxu0 0.0
        %927 = vmatprep.subr.mxu0 0.0
        %928 = vmatpush1.msra.mxu0 0.0
        %929 = vmatprep.subr.mxu0 0.0
        %930 = vmatpush1.msra.mxu0 0.0
        %931 = vmatprep.subr.mxu0 0.0
        %932 = vmatpush1.msra.mxu0 0.0
        %933 = vmatprep.subr.mxu0 0.0
        %934 = vmatpush1.msra.mxu0 0.0
        %935 = vmatprep.subr.mxu0 0.0
        %936 = vmatpush1.msra.mxu0 0.0
        %937 = vmatprep.subr.mxu0 0.0
        %938 = vmatpush1.msra.mxu0 0.0
        %939 = vmatprep.subr.mxu0 0.0
        %940 = vmatpush1.msra.mxu0 0.0
        %941 = vmatprep.subr.mxu0 0.0
        %942 = vmatpush1.msra.mxu0 0.0
        %943 = vmatprep.subr.mxu0 0.0
        %944 = vmatpush1.msra.mxu0 0.0
        %945 = vmatprep.subr.mxu0 0.0
        %946 = vmatpush1.msra.mxu0 0.0
        %947 = vmatprep.subr.mxu0 0.0
        %948 = vmatpush1.msra.mxu0 0.0
        %949 = vmatprep.subr.mxu0 0.0
        %950 = vmatpush1.msra.mxu0 0.0
        %951 = vmatprep.subr.mxu0 0.0
        %952 = vmatpush1.msra.mxu0 0.0
        %953 = vmatprep.subr.mxu0 0.0
        %954 = vmatpush1.msra.mxu0 0.0
        %955 = vmatprep.subr.mxu0 0.0
        %956 = vmatpush1.msra.mxu0 0.0
        %957 = vmatprep.subr.mxu0 0.0
        %958 = vmatpush1.msra.mxu0 0.0
        %959 = vmatprep.subr.mxu0 0.0
        %960 = vmatpush1.msra.mxu0 0.0
        %961 = vmatprep.subr.mxu0 0.0
        %962 = vmatpush1.msra.mxu0 0.0
        %963 = vmatprep.subr.mxu0 0.0
        %964 = vmatpush1.msra.mxu0 0.0
        %965 = vmatprep.subr.mxu0 0.0
        %966 = vmatpush1.msra.mxu0 0.0
        %967 = vmatprep.subr.mxu0 0.0
        %968 = vmatpush1.msra.mxu0 0.0
        %969 = vmatprep.subr.mxu0 0.0
        %970 = vmatpush1.msra.mxu0 0.0
        %971 = vmatprep.subr.mxu0 0.0
        %972 = vmatpush1.msra.mxu0 0.0
        %973 = vmatprep.subr.mxu0 0.0
        %974 = vmatpush1.msra.mxu0 0.0
        %975 = vmatprep.subr.mxu0 0.0
        %976 = vmatpush1.msra.mxu0 0.0
        %977 = vmatprep.subr.mxu0 0.0
        %978 = vmatpush1.msra.mxu0 0.0
        %979 = vmatprep.mubr.f32.mxu0 0.0
        %980 = vmatmul.mubr.f32.gmra.mrb[0].mxu0 %v913
        %v981 = vpop.f32.mrb[0].mxu0
        %v982 = vadd.f32 0.0, %v981
        %v983 = vpop.f32.mrb[0].mxu0
        %984 = vdwg.mxu0
        %v986 = vcombine.high %v982, %v982
        %v988 = vunpack.c.l.s4 1966171168
        %v989 = vunpack.c.0.s8 %v988
        %v990 = vlaneseq
        %v991 = vshrl.u32 %v990, 7
        %v992 = vsub.s32 %v989, %v991
        %v993 = vrot.slane %v982, %v992
        %v995 = vunpack.c.l.s4 1966171168
        %v996 = vunpack.c.0.s8 %v995
        %v997 = vlaneseq
        %v998 = vshrl.u32 %v997, 7
        %v999 = vsub.s32 %v996, %v998
        %v1000 = vrot.slane %v986, %v999
        %v1001 = vcombine.high %v993, %v993
        %v1002 = vcombine.high %v1000, %v1000
        %v1004 = vunpack.c.l.s4 1966171168
        %v1005 = vunpack.c.0.s8 %v1004
        %v1006 = vlaneseq
        %v1007 = vshrl.u32 %v1006, 7
        %v1008 = vsub.s32 %v1005, %v1007
        %v1009 = vrot.slane %v993, %v1008
        %v1011 = vunpack.c.l.s4 1966171168
        %v1012 = vunpack.c.0.s8 %v1011
        %v1013 = vlaneseq
        %v1014 = vshrl.u32 %v1013, 7
        %v1015 = vsub.s32 %v1012, %v1014
        %v1016 = vrot.slane %v1000, %v1015
        %v1018 = vunpack.c.l.s4 1966171168
        %v1019 = vunpack.c.0.s8 %v1018
        %v1020 = vlaneseq
        %v1021 = vshrl.u32 %v1020, 7
        %v1022 = vsub.s32 %v1019, %v1021
        %v1023 = vrot.slane %v1001, %v1022
        %v1025 = vunpack.c.l.s4 1966171168
        %v1026 = vunpack.c.0.s8 %v1025
        %v1027 = vlaneseq
        %v1028 = vshrl.u32 %v1027, 7
        %v1029 = vsub.s32 %v1026, %v1028
        %v1030 = vrot.slane %v1002, %v1029
        %v1031 = vcombine.high %v1009, %v1009
        %v1032 = vcombine.high %v1016, %v1016
        %v1033 = vcombine.high %v1023, %v1023
        %v1034 = vcombine.high %v1030, %v1030
        %s1043 = scalar_lea.vmem %s190, 4 [#allocation2]
        %1044 = vst.msk [vmem:[%s1043] sm:$0x1] %vm463, %v1009
        %1045 = vst.msk [vmem:[%s1043 + $0x10] sm:$0x1] %vm463, %v1023
        %1046 = vst.msk [vmem:[%s1043 + $0x20] sm:$0x1] %vm463, %v1031
        %1047 = vst.msk [vmem:[%s1043 + $0x30] sm:$0x1] %vm463, %v1033
        %1048 = vst.msk [vmem:[%s1043 + $0x40] sm:$0x1] %vm463, %v1016
        %1049 = vst.msk [vmem:[%s1043 + $0x50] sm:$0x1] %vm463, %v1030
        %1050 = vst.msk [vmem:[%s1043 + $0x60] sm:$0x1] %vm463, %v1032
        %1051 = vst.msk [vmem:[%s1043 + $0x70] sm:$0x1] %vm463, %v1034
        %1052 = vrot.lane.b32.xlu0 %v316, 112
        %v1053 = vpop.permute.xlu0 %1052
        %1055 = vrot.lane.b32.xlu0 %v321, 120
        %v1056 = vpop.permute.xlu0 %1055
        %v1058 = vsel %vm330, %v1053, %v1056
        %v1060 = vsel %vm226, %v1058, 0
        %1062 = vmatprep.subr.mxu0 0.0
        %1063 = vmatpush1.msra.mxu0 %v324
        %1064 = vmatprep.subr.mxu0 0.0
        %1065 = vmatpush1.msra.mxu0 %v325
        %1066 = vmatprep.subr.mxu0 0.0
        %1067 = vmatpush1.msra.mxu0 0.0
        %1068 = vmatprep.subr.mxu0 0.0
        %1069 = vmatpush1.msra.mxu0 0.0
        %1070 = vmatprep.subr.mxu0 0.0
        %1071 = vmatpush1.msra.mxu0 0.0
        %1072 = vmatprep.subr.mxu0 0.0
        %1073 = vmatpush1.msra.mxu0 0.0
        %1074 = vmatprep.subr.mxu0 0.0
        %1075 = vmatpush1.msra.mxu0 0.0
        %1076 = vmatprep.subr.mxu0 0.0
        %1077 = vmatpush1.msra.mxu0 0.0
        %1078 = vmatprep.subr.mxu0 0.0
        %1079 = vmatpush1.msra.mxu0 0.0
        %1080 = vmatprep.subr.mxu0 0.0
        %1081 = vmatpush1.msra.mxu0 0.0
        %1082 = vmatprep.subr.mxu0 0.0
        %1083 = vmatpush1.msra.mxu0 0.0
        %1084 = vmatprep.subr.mxu0 0.0
        %1085 = vmatpush1.msra.mxu0 0.0
        %1086 = vmatprep.subr.mxu0 0.0
        %1087 = vmatpush1.msra.mxu0 0.0
        %1088 = vmatprep.subr.mxu0 0.0
        %1089 = vmatpush1.msra.mxu0 0.0
        %1090 = vmatprep.subr.mxu0 0.0
        %1091 = vmatpush1.msra.mxu0 0.0
        %1092 = vmatprep.subr.mxu0 0.0
        %1093 = vmatpush1.msra.mxu0 0.0
        %1094 = vmatprep.subr.mxu0 0.0
        %1095 = vmatpush1.msra.mxu0 0.0
        %1096 = vmatprep.subr.mxu0 0.0
        %1097 = vmatpush1.msra.mxu0 0.0
        %1098 = vmatprep.subr.mxu0 0.0
        %1099 = vmatpush1.msra.mxu0 0.0
        %1100 = vmatprep.subr.mxu0 0.0
        %1101 = vmatpush1.msra.mxu0 0.0
        %1102 = vmatprep.subr.mxu0 0.0
        %1103 = vmatpush1.msra.mxu0 0.0
        %1104 = vmatprep.subr.mxu0 0.0
        %1105 = vmatpush1.msra.mxu0 0.0
        %1106 = vmatprep.subr.mxu0 0.0
        %1107 = vmatpush1.msra.mxu0 0.0
        %1108 = vmatprep.subr.mxu0 0.0
        %1109 = vmatpush1.msra.mxu0 0.0
        %1110 = vmatprep.subr.mxu0 0.0
        %1111 = vmatpush1.msra.mxu0 0.0
        %1112 = vmatprep.subr.mxu0 0.0
        %1113 = vmatpush1.msra.mxu0 0.0
        %1114 = vmatprep.subr.mxu0 0.0
        %1115 = vmatpush1.msra.mxu0 0.0
        %1116 = vmatprep.subr.mxu0 0.0
        %1117 = vmatpush1.msra.mxu0 0.0
        %1118 = vmatprep.subr.mxu0 0.0
        %1119 = vmatpush1.msra.mxu0 0.0
        %1120 = vmatprep.subr.mxu0 0.0
        %1121 = vmatpush1.msra.mxu0 0.0
        %1122 = vmatprep.subr.mxu0 0.0
        %1123 = vmatpush1.msra.mxu0 0.0
        %1124 = vmatprep.subr.mxu0 0.0
        %1125 = vmatpush1.msra.mxu0 0.0
        %1126 = vmatprep.mubr.f32.mxu0 0.0
        %1127 = vmatmul.mubr.f32.gmra.mrb[0].mxu0 %v1060
        %v1128 = vpop.f32.mrb[0].mxu0
        %v1129 = vadd.f32 0.0, %v1128
        %v1130 = vpop.f32.mrb[0].mxu0
        %1131 = vdwg.mxu0
        %v1133 = vcombine.high %v1129, %v1129
        %v1135 = vunpack.c.l.s4 1966171168
        %v1136 = vunpack.c.0.s8 %v1135
        %v1137 = vlaneseq
        %v1138 = vshrl.u32 %v1137, 7
        %v1139 = vsub.s32 %v1136, %v1138
        %v1140 = vrot.slane %v1129, %v1139
        %v1142 = vunpack.c.l.s4 1966171168
        %v1143 = vunpack.c.0.s8 %v1142
        %v1144 = vlaneseq
        %v1145 = vshrl.u32 %v1144, 7
        %v1146 = vsub.s32 %v1143, %v1145
        %v1147 = vrot.slane %v1133, %v1146
        %v1148 = vcombine.high %v1140, %v1140
        %v1149 = vcombine.high %v1147, %v1147
        %v1151 = vunpack.c.l.s4 1966171168
        %v1152 = vunpack.c.0.s8 %v1151
        %v1153 = vlaneseq
        %v1154 = vshrl.u32 %v1153, 7
        %v1155 = vsub.s32 %v1152, %v1154
        %v1156 = vrot.slane %v1140, %v1155
        %v1158 = vunpack.c.l.s4 1966171168
        %v1159 = vunpack.c.0.s8 %v1158
        %v1160 = vlaneseq
        %v1161 = vshrl.u32 %v1160, 7
        %v1162 = vsub.s32 %v1159, %v1161
        %v1163 = vrot.slane %v1147, %v1162
        %v1165 = vunpack.c.l.s4 1966171168
        %v1166 = vunpack.c.0.s8 %v1165
        %v1167 = vlaneseq
        %v1168 = vshrl.u32 %v1167, 7
        %v1169 = vsub.s32 %v1166, %v1168
        %v1170 = vrot.slane %v1148, %v1169
        %v1172 = vunpack.c.l.s4 1966171168
        %v1173 = vunpack.c.0.s8 %v1172
        %v1174 = vlaneseq
        %v1175 = vshrl.u32 %v1174, 7
        %v1176 = vsub.s32 %v1173, %v1175
        %v1177 = vrot.slane %v1149, %v1176
        %v1178 = vcombine.high %v1156, %v1156
        %v1179 = vcombine.high %v1163, %v1163
        %v1180 = vcombine.high %v1170, %v1170
        %v1181 = vcombine.high %v1177, %v1177
        %1190 = vst.msk [vmem:[%s1043 + $0x1] sm:$0x1] %vm463, %v1156
        %1191 = vst.msk [vmem:[%s1043 + $0x11] sm:$0x1] %vm463, %v1170
        %1192 = vst.msk [vmem:[%s1043 + $0x21] sm:$0x1] %vm463, %v1178
        %1193 = vst.msk [vmem:[%s1043 + $0x31] sm:$0x1] %vm463, %v1180
        %1194 = vst.msk [vmem:[%s1043 + $0x41] sm:$0x1] %vm463, %v1163
        %1195 = vst.msk [vmem:[%s1043 + $0x51] sm:$0x1] %vm463, %v1177
        %1196 = vst.msk [vmem:[%s1043 + $0x61] sm:$0x1] %vm463, %v1179
        %1197 = vst.msk [vmem:[%s1043 + $0x71] sm:$0x1] %vm463, %v1181
        %1198 = vrot.lane.b32.xlu0 %v306, 104
        %v1199 = vpop.permute.xlu0 %1198
        %1201 = vrot.lane.b32.xlu0 %v311, 112
        %v1202 = vpop.permute.xlu0 %1201
        %v1204 = vsel %vm330, %v1199, %v1202
        %v1206 = vsel %vm226, %v1204, 0
        %1208 = vmatprep.subr.mxu0 0.0
        %1209 = vmatpush1.msra.mxu0 %v324
        %1210 = vmatprep.subr.mxu0 0.0
        %1211 = vmatpush1.msra.mxu0 %v325
        %1212 = vmatprep.subr.mxu0 0.0
        %1213 = vmatpush1.msra.mxu0 0.0
        %1214 = vmatprep.subr.mxu0 0.0
        %1215 = vmatpush1.msra.mxu0 0.0
        %1216 = vmatprep.subr.mxu0 0.0
        %1217 = vmatpush1.msra.mxu0 0.0
        %1218 = vmatprep.subr.mxu0 0.0
        %1219 = vmatpush1.msra.mxu0 0.0
        %1220 = vmatprep.subr.mxu0 0.0
        %1221 = vmatpush1.msra.mxu0 0.0
        %1222 = vmatprep.subr.mxu0 0.0
        %1223 = vmatpush1.msra.mxu0 0.0
        %1224 = vmatprep.subr.mxu0 0.0
        %1225 = vmatpush1.msra.mxu0 0.0
        %1226 = vmatprep.subr.mxu0 0.0
        %1227 = vmatpush1.msra.mxu0 0.0
        %1228 = vmatprep.subr.mxu0 0.0
        %1229 = vmatpush1.msra.mxu0 0.0
        %1230 = vmatprep.subr.mxu0 0.0
        %1231 = vmatpush1.msra.mxu0 0.0
        %1232 = vmatprep.subr.mxu0 0.0
        %1233 = vmatpush1.msra.mxu0 0.0
        %1234 = vmatprep.subr.mxu0 0.0
        %1235 = vmatpush1.msra.mxu0 0.0
        %1236 = vmatprep.subr.mxu0 0.0
        %1237 = vmatpush1.msra.mxu0 0.0
        %1238 = vmatprep.subr.mxu0 0.0
        %1239 = vmatpush1.msra.mxu0 0.0
        %1240 = vmatprep.subr.mxu0 0.0
        %1241 = vmatpush1.msra.mxu0 0.0
        %1242 = vmatprep.subr.mxu0 0.0
        %1243 = vmatpush1.msra.mxu0 0.0
        %1244 = vmatprep.subr.mxu0 0.0
        %1245 = vmatpush1.msra.mxu0 0.0
        %1246 = vmatprep.subr.mxu0 0.0
        %1247 = vmatpush1.msra.mxu0 0.0
        %1248 = vmatprep.subr.mxu0 0.0
        %1249 = vmatpush1.msra.mxu0 0.0
        %1250 = vmatprep.subr.mxu0 0.0
        %1251 = vmatpush1.msra.mxu0 0.0
        %1252 = vmatprep.subr.mxu0 0.0
        %1253 = vmatpush1.msra.mxu0 0.0
        %1254 = vmatprep.subr.mxu0 0.0
        %1255 = vmatpush1.msra.mxu0 0.0
        %1256 = vmatprep.subr.mxu0 0.0
        %1257 = vmatpush1.msra.mxu0 0.0
        %1258 = vmatprep.subr.mxu0 0.0
        %1259 = vmatpush1.msra.mxu0 0.0
        %1260 = vmatprep.subr.mxu0 0.0
        %1261 = vmatpush1.msra.mxu0 0.0
        %1262 = vmatprep.subr.mxu0 0.0
        %1263 = vmatpush1.msra.mxu0 0.0
        %1264 = vmatprep.subr.mxu0 0.0
        %1265 = vmatpush1.msra.mxu0 0.0
        %1266 = vmatprep.subr.mxu0 0.0
        %1267 = vmatpush1.msra.mxu0 0.0
        %1268 = vmatprep.subr.mxu0 0.0
        %1269 = vmatpush1.msra.mxu0 0.0
        %1270 = vmatprep.subr.mxu0 0.0
        %1271 = vmatpush1.msra.mxu0 0.0
        %1272 = vmatprep.mubr.f32.mxu0 0.0
        %1273 = vmatmul.mubr.f32.gmra.mrb[0].mxu0 %v1206
        %v1274 = vpop.f32.mrb[0].mxu0
        %v1275 = vadd.f32 0.0, %v1274
        %v1276 = vpop.f32.mrb[0].mxu0
        %1277 = vdwg.mxu0
        %v1279 = vcombine.high %v1275, %v1275
        %v1281 = vunpack.c.l.s4 1966171168
        %v1282 = vunpack.c.0.s8 %v1281
        %v1283 = vlaneseq
        %v1284 = vshrl.u32 %v1283, 7
        %v1285 = vsub.s32 %v1282, %v1284
        %v1286 = vrot.slane %v1275, %v1285
        %v1288 = vunpack.c.l.s4 1966171168
        %v1289 = vunpack.c.0.s8 %v1288
        %v1290 = vlaneseq
        %v1291 = vshrl.u32 %v1290, 7
        %v1292 = vsub.s32 %v1289, %v1291
        %v1293 = vrot.slane %v1279, %v1292
        %v1294 = vcombine.high %v1286, %v1286
        %v1295 = vcombine.high %v1293, %v1293
        %v1297 = vunpack.c.l.s4 1966171168
        %v1298 = vunpack.c.0.s8 %v1297
        %v1299 = vlaneseq
        %v1300 = vshrl.u32 %v1299, 7
        %v1301 = vsub.s32 %v1298, %v1300
        %v1302 = vrot.slane %v1286, %v1301
        %v1304 = vunpack.c.l.s4 1966171168
        %v1305 = vunpack.c.0.s8 %v1304
        %v1306 = vlaneseq
        %v1307 = vshrl.u32 %v1306, 7
        %v1308 = vsub.s32 %v1305, %v1307
        %v1309 = vrot.slane %v1293, %v1308
        %v1311 = vunpack.c.l.s4 1966171168
        %v1312 = vunpack.c.0.s8 %v1311
        %v1313 = vlaneseq
        %v1314 = vshrl.u32 %v1313, 7
        %v1315 = vsub.s32 %v1312, %v1314
        %v1316 = vrot.slane %v1294, %v1315
        %v1318 = vunpack.c.l.s4 1966171168
        %v1319 = vunpack.c.0.s8 %v1318
        %v1320 = vlaneseq
        %v1321 = vshrl.u32 %v1320, 7
        %v1322 = vsub.s32 %v1319, %v1321
        %v1323 = vrot.slane %v1295, %v1322
        %v1324 = vcombine.high %v1302, %v1302
        %v1325 = vcombine.high %v1309, %v1309
        %v1326 = vcombine.high %v1316, %v1316
        %v1327 = vcombine.high %v1323, %v1323
        %s1336 = scalar_lea.vmem %s190, 6 [#allocation2]
        %1337 = vst.msk [vmem:[%s1336] sm:$0x1] %vm463, %v1302
        %1338 = vst.msk [vmem:[%s1336 + $0x10] sm:$0x1] %vm463, %v1316
        %1339 = vst.msk [vmem:[%s1336 + $0x20] sm:$0x1] %vm463, %v1324
        %1340 = vst.msk [vmem:[%s1336 + $0x30] sm:$0x1] %vm463, %v1326
        %1341 = vst.msk [vmem:[%s1336 + $0x40] sm:$0x1] %vm463, %v1309
        %1342 = vst.msk [vmem:[%s1336 + $0x50] sm:$0x1] %vm463, %v1323
        %1343 = vst.msk [vmem:[%s1336 + $0x60] sm:$0x1] %vm463, %v1325
        %1344 = vst.msk [vmem:[%s1336 + $0x70] sm:$0x1] %vm463, %v1327
        %1345 = vrot.lane.b32.xlu0 %v316, 104
        %v1346 = vpop.permute.xlu0 %1345
        %1348 = vrot.lane.b32.xlu0 %v321, 112
        %v1349 = vpop.permute.xlu0 %1348
        %v1351 = vsel %vm330, %v1346, %v1349
        %v1353 = vsel %vm226, %v1351, 0
        %1355 = vmatprep.subr.mxu0 0.0
        %1356 = vmatpush1.msra.mxu0 %v324
        %1357 = vmatprep.subr.mxu0 0.0
        %1358 = vmatpush1.msra.mxu0 %v325
        %1359 = vmatprep.subr.mxu0 0.0
        %1360 = vmatpush1.msra.mxu0 0.0
        %1361 = vmatprep.subr.mxu0 0.0
        %1362 = vmatpush1.msra.mxu0 0.0
        %1363 = vmatprep.subr.mxu0 0.0
        %1364 = vmatpush1.msra.mxu0 0.0
        %1365 = vmatprep.subr.mxu0 0.0
        %1366 = vmatpush1.msra.mxu0 0.0
        %1367 = vmatprep.subr.mxu0 0.0
        %1368 = vmatpush1.msra.mxu0 0.0
        %1369 = vmatprep.subr.mxu0 0.0
        %1370 = vmatpush1.msra.mxu0 0.0
        %1371 = vmatprep.subr.mxu0 0.0
        %1372 = vmatpush1.msra.mxu0 0.0
        %1373 = vmatprep.subr.mxu0 0.0
        %1374 = vmatpush1.msra.mxu0 0.0
        %1375 = vmatprep.subr.mxu0 0.0
        %1376 = vmatpush1.msra.mxu0 0.0
        %1377 = vmatprep.subr.mxu0 0.0
        %1378 = vmatpush1.msra.mxu0 0.0
        %1379 = vmatprep.subr.mxu0 0.0
        %1380 = vmatpush1.msra.mxu0 0.0
        %1381 = vmatprep.subr.mxu0 0.0
        %1382 = vmatpush1.msra.mxu0 0.0
        %1383 = vmatprep.subr.mxu0 0.0
        %1384 = vmatpush1.msra.mxu0 0.0
        %1385 = vmatprep.subr.mxu0 0.0
        %1386 = vmatpush1.msra.mxu0 0.0
        %1387 = vmatprep.subr.mxu0 0.0
        %1388 = vmatpush1.msra.mxu0 0.0
        %1389 = vmatprep.subr.mxu0 0.0
        %1390 = vmatpush1.msra.mxu0 0.0
        %1391 = vmatprep.subr.mxu0 0.0
        %1392 = vmatpush1.msra.mxu0 0.0
        %1393 = vmatprep.subr.mxu0 0.0
        %1394 = vmatpush1.msra.mxu0 0.0
        %1395 = vmatprep.subr.mxu0 0.0
        %1396 = vmatpush1.msra.mxu0 0.0
        %1397 = vmatprep.subr.mxu0 0.0
        %1398 = vmatpush1.msra.mxu0 0.0
        %1399 = vmatprep.subr.mxu0 0.0
        %1400 = vmatpush1.msra.mxu0 0.0
        %1401 = vmatprep.subr.mxu0 0.0
        %1402 = vmatpush1.msra.mxu0 0.0
        %1403 = vmatprep.subr.mxu0 0.0
        %1404 = vmatpush1.msra.mxu0 0.0
        %1405 = vmatprep.subr.mxu0 0.0
        %1406 = vmatpush1.msra.mxu0 0.0
        %1407 = vmatprep.subr.mxu0 0.0
        %1408 = vmatpush1.msra.mxu0 0.0
        %1409 = vmatprep.subr.mxu0 0.0
        %1410 = vmatpush1.msra.mxu0 0.0
        %1411 = vmatprep.subr.mxu0 0.0
        %1412 = vmatpush1.msra.mxu0 0.0
        %1413 = vmatprep.subr.mxu0 0.0
        %1414 = vmatpush1.msra.mxu0 0.0
        %1415 = vmatprep.subr.mxu0 0.0
        %1416 = vmatpush1.msra.mxu0 0.0
        %1417 = vmatprep.subr.mxu0 0.0
        %1418 = vmatpush1.msra.mxu0 0.0
        %1419 = vmatprep.mubr.f32.mxu0 0.0
        %1420 = vmatmul.mubr.f32.gmra.mrb[0].mxu0 %v1353
        %v1421 = vpop.f32.mrb[0].mxu0
        %v1422 = vadd.f32 0.0, %v1421
        %v1423 = vpop.f32.mrb[0].mxu0
        %1424 = vdwg.mxu0
        %v1426 = vcombine.high %v1422, %v1422
        %v1428 = vunpack.c.l.s4 1966171168
        %v1429 = vunpack.c.0.s8 %v1428
        %v1430 = vlaneseq
        %v1431 = vshrl.u32 %v1430, 7
        %v1432 = vsub.s32 %v1429, %v1431
        %v1433 = vrot.slane %v1422, %v1432
        %v1435 = vunpack.c.l.s4 1966171168
        %v1436 = vunpack.c.0.s8 %v1435
        %v1437 = vlaneseq
        %v1438 = vshrl.u32 %v1437, 7
        %v1439 = vsub.s32 %v1436, %v1438
        %v1440 = vrot.slane %v1426, %v1439
        %v1441 = vcombine.high %v1433, %v1433
        %v1442 = vcombine.high %v1440, %v1440
        %v1444 = vunpack.c.l.s4 1966171168
        %v1445 = vunpack.c.0.s8 %v1444
        %v1446 = vlaneseq
        %v1447 = vshrl.u32 %v1446, 7
        %v1448 = vsub.s32 %v1445, %v1447
        %v1449 = vrot.slane %v1433, %v1448
        %v1451 = vunpack.c.l.s4 1966171168
        %v1452 = vunpack.c.0.s8 %v1451
        %v1453 = vlaneseq
        %v1454 = vshrl.u32 %v1453, 7
        %v1455 = vsub.s32 %v1452, %v1454
        %v1456 = vrot.slane %v1440, %v1455
        %v1458 = vunpack.c.l.s4 1966171168
        %v1459 = vunpack.c.0.s8 %v1458
        %v1460 = vlaneseq
        %v1461 = vshrl.u32 %v1460, 7
        %v1462 = vsub.s32 %v1459, %v1461
        %v1463 = vrot.slane %v1441, %v1462
        %v1465 = vunpack.c.l.s4 1966171168
        %v1466 = vunpack.c.0.s8 %v1465
        %v1467 = vlaneseq
        %v1468 = vshrl.u32 %v1467, 7
        %v1469 = vsub.s32 %v1466, %v1468
        %v1470 = vrot.slane %v1442, %v1469
        %v1471 = vcombine.high %v1449, %v1449
        %v1472 = vcombine.high %v1456, %v1456
        %v1473 = vcombine.high %v1463, %v1463
        %v1474 = vcombine.high %v1470, %v1470
        %1483 = vst.msk [vmem:[%s1336 + $0x1] sm:$0x1] %vm463, %v1449
        %1484 = vst.msk [vmem:[%s1336 + $0x11] sm:$0x1] %vm463, %v1463
        %1485 = vst.msk [vmem:[%s1336 + $0x21] sm:$0x1] %vm463, %v1471
        %1486 = vst.msk [vmem:[%s1336 + $0x31] sm:$0x1] %vm463, %v1473
        %1487 = vst.msk [vmem:[%s1336 + $0x41] sm:$0x1] %vm463, %v1456
        %1488 = vst.msk [vmem:[%s1336 + $0x51] sm:$0x1] %vm463, %v1470
        %1489 = vst.msk [vmem:[%s1336 + $0x61] sm:$0x1] %vm463, %v1472
        %1490 = vst.msk [vmem:[%s1336 + $0x71] sm:$0x1] %vm463, %v1474
        %1491 = vrot.lane.b32.xlu0 %v306, 96
        %v1492 = vpop.permute.xlu0 %1491
        %1494 = vrot.lane.b32.xlu0 %v311, 104
        %v1495 = vpop.permute.xlu0 %1494
        %v1497 = vsel %vm330, %v1492, %v1495
        %v1499 = vsel %vm226, %v1497, 0
        %1501 = vmatprep.subr.mxu0 0.0
        %1502 = vmatpush1.msra.mxu0 %v324
        %1503 = vmatprep.subr.mxu0 0.0
        %1504 = vmatpush1.msra.mxu0 %v325
        %1505 = vmatprep.subr.mxu0 0.0
        %1506 = vmatpush1.msra.mxu0 0.0
        %1507 = vmatprep.subr.mxu0 0.0
        %1508 = vmatpush1.msra.mxu0 0.0
        %1509 = vmatprep.subr.mxu0 0.0
        %1510 = vmatpush1.msra.mxu0 0.0
        %1511 = vmatprep.subr.mxu0 0.0
        %1512 = vmatpush1.msra.mxu0 0.0
        %1513 = vmatprep.subr.mxu0 0.0
        %1514 = vmatpush1.msra.mxu0 0.0
        %1515 = vmatprep.subr.mxu0 0.0
        %1516 = vmatpush1.msra.mxu0 0.0
        %1517 = vmatprep.subr.mxu0 0.0
        %1518 = vmatpush1.msra.mxu0 0.0
        %1519 = vmatprep.subr.mxu0 0.0
        %1520 = vmatpush1.msra.mxu0 0.0
        %1521 = vmatprep.subr.mxu0 0.0
        %1522 = vmatpush1.msra.mxu0 0.0
        %1523 = vmatprep.subr.mxu0 0.0
        %1524 = vmatpush1.msra.mxu0 0.0
        %1525 = vmatprep.subr.mxu0 0.0
        %1526 = vmatpush1.msra.mxu0 0.0
        %1527 = vmatprep.subr.mxu0 0.0
        %1528 = vmatpush1.msra.mxu0 0.0
        %1529 = vmatprep.subr.mxu0 0.0
        %1530 = vmatpush1.msra.mxu0 0.0
        %1531 = vmatprep.subr.mxu0 0.0
        %1532 = vmatpush1.msra.mxu0 0.0
        %1533 = vmatprep.subr.mxu0 0.0
        %1534 = vmatpush1.msra.mxu0 0.0
        %1535 = vmatprep.subr.mxu0 0.0
        %1536 = vmatpush1.msra.mxu0 0.0
        %1537 = vmatprep.subr.mxu0 0.0
        %1538 = vmatpush1.msra.mxu0 0.0
        %1539 = vmatprep.subr.mxu0 0.0
        %1540 = vmatpush1.msra.mxu0 0.0
        %1541 = vmatprep.subr.mxu0 0.0
        %1542 = vmatpush1.msra.mxu0 0.0
        %1543 = vmatprep.subr.mxu0 0.0
        %1544 = vmatpush1.msra.mxu0 0.0
        %1545 = vmatprep.subr.mxu0 0.0
        %1546 = vmatpush1.msra.mxu0 0.0
        %1547 = vmatprep.subr.mxu0 0.0
        %1548 = vmatpush1.msra.mxu0 0.0
        %1549 = vmatprep.subr.mxu0 0.0
        %1550 = vmatpush1.msra.mxu0 0.0
        %1551 = vmatprep.subr.mxu0 0.0
        %1552 = vmatpush1.msra.mxu0 0.0
        %1553 = vmatprep.subr.mxu0 0.0
        %1554 = vmatpush1.msra.mxu0 0.0
        %1555 = vmatprep.subr.mxu0 0.0
        %1556 = vmatpush1.msra.mxu0 0.0
        %1557 = vmatprep.subr.mxu0 0.0
        %1558 = vmatpush1.msra.mxu0 0.0
        %1559 = vmatprep.subr.mxu0 0.0
        %1560 = vmatpush1.msra.mxu0 0.0
        %1561 = vmatprep.subr.mxu0 0.0
        %1562 = vmatpush1.msra.mxu0 0.0
        %1563 = vmatprep.subr.mxu0 0.0
        %1564 = vmatpush1.msra.mxu0 0.0
        %1565 = vmatprep.mubr.f32.mxu0 0.0
        %1566 = vmatmul.mubr.f32.gmra.mrb[0].mxu0 %v1499
        %v1567 = vpop.f32.mrb[0].mxu0
        %v1568 = vadd.f32 0.0, %v1567
        %v1569 = vpop.f32.mrb[0].mxu0
        %1570 = vdwg.mxu0
        %v1572 = vcombine.high %v1568, %v1568
        %v1574 = vunpack.c.l.s4 1966171168
        %v1575 = vunpack.c.0.s8 %v1574
        %v1576 = vlaneseq
        %v1577 = vshrl.u32 %v1576, 7
        %v1578 = vsub.s32 %v1575, %v1577
        %v1579 = vrot.slane %v1568, %v1578
        %v1581 = vunpack.c.l.s4 1966171168
        %v1582 = vunpack.c.0.s8 %v1581
        %v1583 = vlaneseq
        %v1584 = vshrl.u32 %v1583, 7
        %v1585 = vsub.s32 %v1582, %v1584
        %v1586 = vrot.slane %v1572, %v1585
        %v1587 = vcombine.high %v1579, %v1579
        %v1588 = vcombine.high %v1586, %v1586
        %v1590 = vunpack.c.l.s4 1966171168
        %v1591 = vunpack.c.0.s8 %v1590
        %v1592 = vlaneseq
        %v1593 = vshrl.u32 %v1592, 7
        %v1594 = vsub.s32 %v1591, %v1593
        %v1595 = vrot.slane %v1579, %v1594
        %v1597 = vunpack.c.l.s4 1966171168
        %v1598 = vunpack.c.0.s8 %v1597
        %v1599 = vlaneseq
        %v1600 = vshrl.u32 %v1599, 7
        %v1601 = vsub.s32 %v1598, %v1600
        %v1602 = vrot.slane %v1586, %v1601
        %v1604 = vunpack.c.l.s4 1966171168
        %v1605 = vunpack.c.0.s8 %v1604
        %v1606 = vlaneseq
        %v1607 = vshrl.u32 %v1606, 7
        %v1608 = vsub.s32 %v1605, %v1607
        %v1609 = vrot.slane %v1587, %v1608
        %v1611 = vunpack.c.l.s4 1966171168
        %v1612 = vunpack.c.0.s8 %v1611
        %v1613 = vlaneseq
        %v1614 = vshrl.u32 %v1613, 7
        %v1615 = vsub.s32 %v1612, %v1614
        %v1616 = vrot.slane %v1588, %v1615
        %v1617 = vcombine.high %v1595, %v1595
        %v1618 = vcombine.high %v1602, %v1602
        %v1619 = vcombine.high %v1609, %v1609
        %v1620 = vcombine.high %v1616, %v1616
        %s1629 = scalar_lea.vmem %s190, 8 [#allocation2]
        %1630 = vst.msk [vmem:[%s1629] sm:$0x1] %vm463, %v1595
        %1631 = vst.msk [vmem:[%s1629 + $0x10] sm:$0x1] %vm463, %v1609
        %1632 = vst.msk [vmem:[%s1629 + $0x20] sm:$0x1] %vm463, %v1617
        %1633 = vst.msk [vmem:[%s1629 + $0x30] sm:$0x1] %vm463, %v1619
        %1634 = vst.msk [vmem:[%s1629 + $0x40] sm:$0x1] %vm463, %v1602
        %1635 = vst.msk [vmem:[%s1629 + $0x50] sm:$0x1] %vm463, %v1616
        %1636 = vst.msk [vmem:[%s1629 + $0x60] sm:$0x1] %vm463, %v1618
        %1637 = vst.msk [vmem:[%s1629 + $0x70] sm:$0x1] %vm463, %v1620
        %1638 = vrot.lane.b32.xlu0 %v316, 96
        %v1639 = vpop.permute.xlu0 %1638
        %1641 = vrot.lane.b32.xlu0 %v321, 104
        %v1642 = vpop.permute.xlu0 %1641
        %v1644 = vsel %vm330, %v1639, %v1642
        %v1646 = vsel %vm226, %v1644, 0
        %1648 = vmatprep.subr.mxu0 0.0
        %1649 = vmatpush1.msra.mxu0 %v324
        %1650 = vmatprep.subr.mxu0 0.0
        %1651 = vmatpush1.msra.mxu0 %v325
        %1652 = vmatprep.subr.mxu0 0.0
        %1653 = vmatpush1.msra.mxu0 0.0
        %1654 = vmatprep.subr.mxu0 0.0
        %1655 = vmatpush1.msra.mxu0 0.0
        %1656 = vmatprep.subr.mxu0 0.0
        %1657 = vmatpush1.msra.mxu0 0.0
        %1658 = vmatprep.subr.mxu0 0.0
        %1659 = vmatpush1.msra.mxu0 0.0
        %1660 = vmatprep.subr.mxu0 0.0
        %1661 = vmatpush1.msra.mxu0 0.0
        %1662 = vmatprep.subr.mxu0 0.0
        %1663 = vmatpush1.msra.mxu0 0.0
        %1664 = vmatprep.subr.mxu0 0.0
        %1665 = vmatpush1.msra.mxu0 0.0
        %1666 = vmatprep.subr.mxu0 0.0
        %1667 = vmatpush1.msra.mxu0 0.0
        %1668 = vmatprep.subr.mxu0 0.0
        %1669 = vmatpush1.msra.mxu0 0.0
        %1670 = vmatprep.subr.mxu0 0.0
        %1671 = vmatpush1.msra.mxu0 0.0
        %1672 = vmatprep.subr.mxu0 0.0
        %1673 = vmatpush1.msra.mxu0 0.0
        %1674 = vmatprep.subr.mxu0 0.0
        %1675 = vmatpush1.msra.mxu0 0.0
        %1676 = vmatprep.subr.mxu0 0.0
        %1677 = vmatpush1.msra.mxu0 0.0
        %1678 = vmatprep.subr.mxu0 0.0
        %1679 = vmatpush1.msra.mxu0 0.0
        %1680 = vmatprep.subr.mxu0 0.0
        %1681 = vmatpush1.msra.mxu0 0.0
        %1682 = vmatprep.subr.mxu0 0.0
        %1683 = vmatpush1.msra.mxu0 0.0
        %1684 = vmatprep.subr.mxu0 0.0
        %1685 = vmatpush1.msra.mxu0 0.0
        %1686 = vmatprep.subr.mxu0 0.0
        %1687 = vmatpush1.msra.mxu0 0.0
        %1688 = vmatprep.subr.mxu0 0.0
        %1689 = vmatpush1.msra.mxu0 0.0
        %1690 = vmatprep.subr.mxu0 0.0
        %1691 = vmatpush1.msra.mxu0 0.0
        %1692 = vmatprep.subr.mxu0 0.0
        %1693 = vmatpush1.msra.mxu0 0.0
        %1694 = vmatprep.subr.mxu0 0.0
        %1695 = vmatpush1.msra.mxu0 0.0
        %1696 = vmatprep.subr.mxu0 0.0
        %1697 = vmatpush1.msra.mxu0 0.0
        %1698 = vmatprep.subr.mxu0 0.0
        %1699 = vmatpush1.msra.mxu0 0.0
        %1700 = vmatprep.subr.mxu0 0.0
        %1701 = vmatpush1.msra.mxu0 0.0
        %1702 = vmatprep.subr.mxu0 0.0
        %1703 = vmatpush1.msra.mxu0 0.0
        %1704 = vmatprep.subr.mxu0 0.0
        %1705 = vmatpush1.msra.mxu0 0.0
        %1706 = vmatprep.subr.mxu0 0.0
        %1707 = vmatpush1.msra.mxu0 0.0
        %1708 = vmatprep.subr.mxu0 0.0
        %1709 = vmatpush1.msra.mxu0 0.0
        %1710 = vmatprep.subr.mxu0 0.0
        %1711 = vmatpush1.msra.mxu0 0.0
        %1712 = vmatprep.mubr.f32.mxu0 0.0
        %1713 = vmatmul.mubr.f32.gmra.mrb[0].mxu0 %v1646
        %v1714 = vpop.f32.mrb[0].mxu0
        %v1715 = vadd.f32 0.0, %v1714
        %v1716 = vpop.f32.mrb[0].mxu0
        %1717 = vdwg.mxu0
        %v1719 = vcombine.high %v1715, %v1715
        %v1721 = vunpack.c.l.s4 1966171168
        %v1722 = vunpack.c.0.s8 %v1721
        %v1723 = vlaneseq
        %v1724 = vshrl.u32 %v1723, 7
        %v1725 = vsub.s32 %v1722, %v1724
        %v1726 = vrot.slane %v1715, %v1725
        %v1728 = vunpack.c.l.s4 1966171168
        %v1729 = vunpack.c.0.s8 %v1728
        %v1730 = vlaneseq
        %v1731 = vshrl.u32 %v1730, 7
        %v1732 = vsub.s32 %v1729, %v1731
        %v1733 = vrot.slane %v1719, %v1732
        %v1734 = vcombine.high %v1726, %v1726
        %v1735 = vcombine.high %v1733, %v1733
        %v1737 = vunpack.c.l.s4 1966171168
        %v1738 = vunpack.c.0.s8 %v1737
        %v1739 = vlaneseq
        %v1740 = vshrl.u32 %v1739, 7
        %v1741 = vsub.s32 %v1738, %v1740
        %v1742 = vrot.slane %v1726, %v1741
        %v1744 = vunpack.c.l.s4 1966171168
        %v1745 = vunpack.c.0.s8 %v1744
        %v1746 = vlaneseq
        %v1747 = vshrl.u32 %v1746, 7
        %v1748 = vsub.s32 %v1745, %v1747
        %v1749 = vrot.slane %v1733, %v1748
        %v1751 = vunpack.c.l.s4 1966171168
        %v1752 = vunpack.c.0.s8 %v1751
        %v1753 = vlaneseq
        %v1754 = vshrl.u32 %v1753, 7
        %v1755 = vsub.s32 %v1752, %v1754
        %v1756 = vrot.slane %v1734, %v1755
        %v1758 = vunpack.c.l.s4 1966171168
        %v1759 = vunpack.c.0.s8 %v1758
        %v1760 = vlaneseq
        %v1761 = vshrl.u32 %v1760, 7
        %v1762 = vsub.s32 %v1759, %v1761
        %v1763 = vrot.slane %v1735, %v1762
        %v1764 = vcombine.high %v1742, %v1742
        %v1765 = vcombine.high %v1749, %v1749
        %v1766 = vcombine.high %v1756, %v1756
        %v1767 = vcombine.high %v1763, %v1763
        %1776 = vst.msk [vmem:[%s1629 + $0x1] sm:$0x1] %vm463, %v1742
        %1777 = vst.msk [vmem:[%s1629 + $0x11] sm:$0x1] %vm463, %v1756
        %1778 = vst.msk [vmem:[%s1629 + $0x21] sm:$0x1] %vm463, %v1764
        %1779 = vst.msk [vmem:[%s1629 + $0x31] sm:$0x1] %vm463, %v1766
        %1780 = vst.msk [vmem:[%s1629 + $0x41] sm:$0x1] %vm463, %v1749
        %1781 = vst.msk [vmem:[%s1629 + $0x51] sm:$0x1] %vm463, %v1763
        %1782 = vst.msk [vmem:[%s1629 + $0x61] sm:$0x1] %vm463, %v1765
        %1783 = vst.msk [vmem:[%s1629 + $0x71] sm:$0x1] %vm463, %v1767
        %1784 = vrot.lane.b32.xlu0 %v306, 88
        %v1785 = vpop.permute.xlu0 %1784
        %1787 = vrot.lane.b32.xlu0 %v311, 96
        %v1788 = vpop.permute.xlu0 %1787
        %v1790 = vsel %vm330, %v1785, %v1788
        %v1792 = vsel %vm226, %v1790, 0
        %1794 = vmatprep.subr.mxu0 0.0
        %1795 = vmatpush1.msra.mxu0 %v324
        %1796 = vmatprep.subr.mxu0 0.0
        %1797 = vmatpush1.msra.mxu0 %v325
        %1798 = vmatprep.subr.mxu0 0.0
        %1799 = vmatpush1.msra.mxu0 0.0
        %1800 = vmatprep.subr.mxu0 0.0
        %1801 = vmatpush1.msra.mxu0 0.0
        %1802 = vmatprep.subr.mxu0 0.0
        %1803 = vmatpush1.msra.mxu0 0.0
        %1804 = vmatprep.subr.mxu0 0.0
        %1805 = vmatpush1.msra.mxu0 0.0
        %1806 = vmatprep.subr.mxu0 0.0
        %1807 = vmatpush1.msra.mxu0 0.0
        %1808 = vmatprep.subr.mxu0 0.0
        %1809 = vmatpush1.msra.mxu0 0.0
        %1810 = vmatprep.subr.mxu0 0.0
        %1811 = vmatpush1.msra.mxu0 0.0
        %1812 = vmatprep.subr.mxu0 0.0
        %1813 = vmatpush1.msra.mxu0 0.0
        %1814 = vmatprep.subr.mxu0 0.0
        %1815 = vmatpush1.msra.mxu0 0.0
        %1816 = vmatprep.subr.mxu0 0.0
        %1817 = vmatpush1.msra.mxu0 0.0
        %1818 = vmatprep.subr.mxu0 0.0
        %1819 = vmatpush1.msra.mxu0 0.0
        %1820 = vmatprep.subr.mxu0 0.0
        %1821 = vmatpush1.msra.mxu0 0.0
        %1822 = vmatprep.subr.mxu0 0.0
        %1823 = vmatpush1.msra.mxu0 0.0
        %1824 = vmatprep.subr.mxu0 0.0
        %1825 = vmatpush1.msra.mxu0 0.0
        %1826 = vmatprep.subr.mxu0 0.0
        %1827 = vmatpush1.msra.mxu0 0.0
        %1828 = vmatprep.subr.mxu0 0.0
        %1829 = vmatpush1.msra.mxu0 0.0
        %1830 = vmatprep.subr.mxu0 0.0
        %1831 = vmatpush1.msra.mxu0 0.0
        %1832 = vmatprep.subr.mxu0 0.0
        %1833 = vmatpush1.msra.mxu0 0.0
        %1834 = vmatprep.subr.mxu0 0.0
        %1835 = vmatpush1.msra.mxu0 0.0
        %1836 = vmatprep.subr.mxu0 0.0
        %1837 = vmatpush1.msra.mxu0 0.0
        %1838 = vmatprep.subr.mxu0 0.0
        %1839 = vmatpush1.msra.mxu0 0.0
        %1840 = vmatprep.subr.mxu0 0.0
        %1841 = vmatpush1.msra.mxu0 0.0
        %1842 = vmatprep.subr.mxu0 0.0
        %1843 = vmatpush1.msra.mxu0 0.0
        %1844 = vmatprep.subr.mxu0 0.0
        %1845 = vmatpush1.msra.mxu0 0.0
        %1846 = vmatprep.subr.mxu0 0.0
        %1847 = vmatpush1.msra.mxu0 0.0
        %1848 = vmatprep.subr.mxu0 0.0
        %1849 = vmatpush1.msra.mxu0 0.0
        %1850 = vmatprep.subr.mxu0 0.0
        %1851 = vmatpush1.msra.mxu0 0.0
        %1852 = vmatprep.subr.mxu0 0.0
        %1853 = vmatpush1.msra.mxu0 0.0
        %1854 = vmatprep.subr.mxu0 0.0
        %1855 = vmatpush1.msra.mxu0 0.0
        %1856 = vmatprep.subr.mxu0 0.0
        %1857 = vmatpush1.msra.mxu0 0.0
        %1858 = vmatprep.mubr.f32.mxu0 0.0
        %1859 = vmatmul.mubr.f32.gmra.mrb[0].mxu0 %v1792
        %v1860 = vpop.f32.mrb[0].mxu0
        %v1861 = vadd.f32 0.0, %v1860
        %v1862 = vpop.f32.mrb[0].mxu0
        %1863 = vdwg.mxu0
        %v1865 = vcombine.high %v1861, %v1861
        %v1867 = vunpack.c.l.s4 1966171168
        %v1868 = vunpack.c.0.s8 %v1867
        %v1869 = vlaneseq
        %v1870 = vshrl.u32 %v1869, 7
        %v1871 = vsub.s32 %v1868, %v1870
        %v1872 = vrot.slane %v1861, %v1871
        %v1874 = vunpack.c.l.s4 1966171168
        %v1875 = vunpack.c.0.s8 %v1874
        %v1876 = vlaneseq
        %v1877 = vshrl.u32 %v1876, 7
        %v1878 = vsub.s32 %v1875, %v1877
        %v1879 = vrot.slane %v1865, %v1878
        %v1880 = vcombine.high %v1872, %v1872
        %v1881 = vcombine.high %v1879, %v1879
        %v1883 = vunpack.c.l.s4 1966171168
        %v1884 = vunpack.c.0.s8 %v1883
        %v1885 = vlaneseq
        %v1886 = vshrl.u32 %v1885, 7
        %v1887 = vsub.s32 %v1884, %v1886
        %v1888 = vrot.slane %v1872, %v1887
        %v1890 = vunpack.c.l.s4 1966171168
        %v1891 = vunpack.c.0.s8 %v1890
        %v1892 = vlaneseq
        %v1893 = vshrl.u32 %v1892, 7
        %v1894 = vsub.s32 %v1891, %v1893
        %v1895 = vrot.slane %v1879, %v1894
        %v1897 = vunpack.c.l.s4 1966171168
        %v1898 = vunpack.c.0.s8 %v1897
        %v1899 = vlaneseq
        %v1900 = vshrl.u32 %v1899, 7
        %v1901 = vsub.s32 %v1898, %v1900
        %v1902 = vrot.slane %v1880, %v1901
        %v1904 = vunpack.c.l.s4 1966171168
        %v1905 = vunpack.c.0.s8 %v1904
        %v1906 = vlaneseq
        %v1907 = vshrl.u32 %v1906, 7
        %v1908 = vsub.s32 %v1905, %v1907
        %v1909 = vrot.slane %v1881, %v1908
        %v1910 = vcombine.high %v1888, %v1888
        %v1911 = vcombine.high %v1895, %v1895
        %v1912 = vcombine.high %v1902, %v1902
        %v1913 = vcombine.high %v1909, %v1909
        %s1922 = scalar_lea.vmem %s190, 10 [#allocation2]
        %1923 = vst.msk [vmem:[%s1922] sm:$0x1] %vm463, %v1888
        %1924 = vst.msk [vmem:[%s1922 + $0x10] sm:$0x1] %vm463, %v1902
        %1925 = vst.msk [vmem:[%s1922 + $0x20] sm:$0x1] %vm463, %v1910
        %1926 = vst.msk [vmem:[%s1922 + $0x30] sm:$0x1] %vm463, %v1912
        %1927 = vst.msk [vmem:[%s1922 + $0x40] sm:$0x1] %vm463, %v1895
        %1928 = vst.msk [vmem:[%s1922 + $0x50] sm:$0x1] %vm463, %v1909
        %1929 = vst.msk [vmem:[%s1922 + $0x60] sm:$0x1] %vm463, %v1911
        %1930 = vst.msk [vmem:[%s1922 + $0x70] sm:$0x1] %vm463, %v1913
        %1931 = vrot.lane.b32.xlu0 %v316, 88
        %v1932 = vpop.permute.xlu0 %1931
        %1934 = vrot.lane.b32.xlu0 %v321, 96
        %v1935 = vpop.permute.xlu0 %1934
        %v1937 = vsel %vm330, %v1932, %v1935
        %v1939 = vsel %vm226, %v1937, 0
        %1941 = vmatprep.subr.mxu0 0.0
        %1942 = vmatpush1.msra.mxu0 %v324
        %1943 = vmatprep.subr.mxu0 0.0
        %1944 = vmatpush1.msra.mxu0 %v325
        %1945 = vmatprep.subr.mxu0 0.0
        %1946 = vmatpush1.msra.mxu0 0.0
        %1947 = vmatprep.subr.mxu0 0.0
        %1948 = vmatpush1.msra.mxu0 0.0
        %1949 = vmatprep.subr.mxu0 0.0
        %1950 = vmatpush1.msra.mxu0 0.0
        %1951 = vmatprep.subr.mxu0 0.0
        %1952 = vmatpush1.msra.mxu0 0.0
        %1953 = vmatprep.subr.mxu0 0.0
        %1954 = vmatpush1.msra.mxu0 0.0
        %1955 = vmatprep.subr.mxu0 0.0
        %1956 = vmatpush1.msra.mxu0 0.0
        %1957 = vmatprep.subr.mxu0 0.0
        %1958 = vmatpush1.msra.mxu0 0.0
        %1959 = vmatprep.subr.mxu0 0.0
        %1960 = vmatpush1.msra.mxu0 0.0
        %1961 = vmatprep.subr.mxu0 0.0
        %1962 = vmatpush1.msra.mxu0 0.0
        %1963 = vmatprep.subr.mxu0 0.0
        %1964 = vmatpush1.msra.mxu0 0.0
        %1965 = vmatprep.subr.mxu0 0.0
        %1966 = vmatpush1.msra.mxu0 0.0
        %1967 = vmatprep.subr.mxu0 0.0
        %1968 = vmatpush1.msra.mxu0 0.0
        %1969 = vmatprep.subr.mxu0 0.0
        %1970 = vmatpush1.msra.mxu0 0.0
        %1971 = vmatprep.subr.mxu0 0.0
        %1972 = vmatpush1.msra.mxu0 0.0
        %1973 = vmatprep.subr.mxu0 0.0
        %1974 = vmatpush1.msra.mxu0 0.0
        %1975 = vmatprep.subr.mxu0 0.0
        %1976 = vmatpush1.msra.mxu0 0.0
        %1977 = vmatprep.subr.mxu0 0.0
        %1978 = vmatpush1.msra.mxu0 0.0
        %1979 = vmatprep.subr.mxu0 0.0
        %1980 = vmatpush1.msra.mxu0 0.0
        %1981 = vmatprep.subr.mxu0 0.0
        %1982 = vmatpush1.msra.mxu0 0.0
        %1983 = vmatprep.subr.mxu0 0.0
        %1984 = vmatpush1.msra.mxu0 0.0
        %1985 = vmatprep.subr.mxu0 0.0
        %1986 = vmatpush1.msra.mxu0 0.0
        %1987 = vmatprep.subr.mxu0 0.0
        %1988 = vmatpush1.msra.mxu0 0.0
        %1989 = vmatprep.subr.mxu0 0.0
        %1990 = vmatpush1.msra.mxu0 0.0
        %1991 = vmatprep.subr.mxu0 0.0
        %1992 = vmatpush1.msra.mxu0 0.0
        %1993 = vmatprep.subr.mxu0 0.0
        %1994 = vmatpush1.msra.mxu0 0.0
        %1995 = vmatprep.subr.mxu0 0.0
        %1996 = vmatpush1.msra.mxu0 0.0
        %1997 = vmatprep.subr.mxu0 0.0
        %1998 = vmatpush1.msra.mxu0 0.0
        %1999 = vmatprep.subr.mxu0 0.0
        %2000 = vmatpush1.msra.mxu0 0.0
        %2001 = vmatprep.subr.mxu0 0.0
        %2002 = vmatpush1.msra.mxu0 0.0
        %2003 = vmatprep.subr.mxu0 0.0
        %2004 = vmatpush1.msra.mxu0 0.0
        %2005 = vmatprep.mubr.f32.mxu0 0.0
        %2006 = vmatmul.mubr.f32.gmra.mrb[0].mxu0 %v1939
        %v2007 = vpop.f32.mrb[0].mxu0
        %v2008 = vadd.f32 0.0, %v2007
        %v2009 = vpop.f32.mrb[0].mxu0
        %2010 = vdwg.mxu0
        %v2012 = vcombine.high %v2008, %v2008
        %v2014 = vunpack.c.l.s4 1966171168
        %v2015 = vunpack.c.0.s8 %v2014
        %v2016 = vlaneseq
        %v2017 = vshrl.u32 %v2016, 7
        %v2018 = vsub.s32 %v2015, %v2017
        %v2019 = vrot.slane %v2008, %v2018
        %v2021 = vunpack.c.l.s4 1966171168
        %v2022 = vunpack.c.0.s8 %v2021
        %v2023 = vlaneseq
        %v2024 = vshrl.u32 %v2023, 7
        %v2025 = vsub.s32 %v2022, %v2024
        %v2026 = vrot.slane %v2012, %v2025
        %v2027 = vcombine.high %v2019, %v2019
        %v2028 = vcombine.high %v2026, %v2026
        %v2030 = vunpack.c.l.s4 1966171168
        %v2031 = vunpack.c.0.s8 %v2030
        %v2032 = vlaneseq
        %v2033 = vshrl.u32 %v2032, 7
        %v2034 = vsub.s32 %v2031, %v2033
        %v2035 = vrot.slane %v2019, %v2034
        %v2037 = vunpack.c.l.s4 1966171168
        %v2038 = vunpack.c.0.s8 %v2037
        %v2039 = vlaneseq
        %v2040 = vshrl.u32 %v2039, 7
        %v2041 = vsub.s32 %v2038, %v2040
        %v2042 = vrot.slane %v2026, %v2041
        %v2044 = vunpack.c.l.s4 1966171168
        %v2045 = vunpack.c.0.s8 %v2044
        %v2046 = vlaneseq
        %v2047 = vshrl.u32 %v2046, 7
        %v2048 = vsub.s32 %v2045, %v2047
        %v2049 = vrot.slane %v2027, %v2048
        %v2051 = vunpack.c.l.s4 1966171168
        %v2052 = vunpack.c.0.s8 %v2051
        %v2053 = vlaneseq
        %v2054 = vshrl.u32 %v2053, 7
        %v2055 = vsub.s32 %v2052, %v2054
        %v2056 = vrot.slane %v2028, %v2055
        %v2057 = vcombine.high %v2035, %v2035
        %v2058 = vcombine.high %v2042, %v2042
        %v2059 = vcombine.high %v2049, %v2049
        %v2060 = vcombine.high %v2056, %v2056
        %2069 = vst.msk [vmem:[%s1922 + $0x1] sm:$0x1] %vm463, %v2035
        %2070 = vst.msk [vmem:[%s1922 + $0x11] sm:$0x1] %vm463, %v2049
        %2071 = vst.msk [vmem:[%s1922 + $0x21] sm:$0x1] %vm463, %v2057
        %2072 = vst.msk [vmem:[%s1922 + $0x31] sm:$0x1] %vm463, %v2059
        %2073 = vst.msk [vmem:[%s1922 + $0x41] sm:$0x1] %vm463, %v2042
        %2074 = vst.msk [vmem:[%s1922 + $0x51] sm:$0x1] %vm463, %v2056
        %2075 = vst.msk [vmem:[%s1922 + $0x61] sm:$0x1] %vm463, %v2058
        %2076 = vst.msk [vmem:[%s1922 + $0x71] sm:$0x1] %vm463, %v2060
        %2077 = vrot.lane.b32.xlu0 %v306, 80
        %v2078 = vpop.permute.xlu0 %2077
        %2080 = vrot.lane.b32.xlu0 %v311, 88
        %v2081 = vpop.permute.xlu0 %2080
        %v2083 = vsel %vm330, %v2078, %v2081
        %v2085 = vsel %vm226, %v2083, 0
        %2087 = vmatprep.subr.mxu0 0.0
        %2088 = vmatpush1.msra.mxu0 %v324
        %2089 = vmatprep.subr.mxu0 0.0
        %2090 = vmatpush1.msra.mxu0 %v325
        %2091 = vmatprep.subr.mxu0 0.0
        %2092 = vmatpush1.msra.mxu0 0.0
        %2093 = vmatprep.subr.mxu0 0.0
        %2094 = vmatpush1.msra.mxu0 0.0
        %2095 = vmatprep.subr.mxu0 0.0
        %2096 = vmatpush1.msra.mxu0 0.0
        %2097 = vmatprep.subr.mxu0 0.0
        %2098 = vmatpush1.msra.mxu0 0.0
        %2099 = vmatprep.subr.mxu0 0.0
        %2100 = vmatpush1.msra.mxu0 0.0
        %2101 = vmatprep.subr.mxu0 0.0
        %2102 = vmatpush1.msra.mxu0 0.0
        %2103 = vmatprep.subr.mxu0 0.0
        %2104 = vmatpush1.msra.mxu0 0.0
        %2105 = vmatprep.subr.mxu0 0.0
        %2106 = vmatpush1.msra.mxu0 0.0
        %2107 = vmatprep.subr.mxu0 0.0
        %2108 = vmatpush1.msra.mxu0 0.0
        %2109 = vmatprep.subr.mxu0 0.0
        %2110 = vmatpush1.msra.mxu0 0.0
        %2111 = vmatprep.subr.mxu0 0.0
        %2112 = vmatpush1.msra.mxu0 0.0
        %2113 = vmatprep.subr.mxu0 0.0
        %2114 = vmatpush1.msra.mxu0 0.0
        %2115 = vmatprep.subr.mxu0 0.0
        %2116 = vmatpush1.msra.mxu0 0.0
        %2117 = vmatprep.subr.mxu0 0.0
        %2118 = vmatpush1.msra.mxu0 0.0
        %2119 = vmatprep.subr.mxu0 0.0
        %2120 = vmatpush1.msra.mxu0 0.0
        %2121 = vmatprep.subr.mxu0 0.0
        %2122 = vmatpush1.msra.mxu0 0.0
        %2123 = vmatprep.subr.mxu0 0.0
        %2124 = vmatpush1.msra.mxu0 0.0
        %2125 = vmatprep.subr.mxu0 0.0
        %2126 = vmatpush1.msra.mxu0 0.0
        %2127 = vmatprep.subr.mxu0 0.0
        %2128 = vmatpush1.msra.mxu0 0.0
        %2129 = vmatprep.subr.mxu0 0.0
        %2130 = vmatpush1.msra.mxu0 0.0
        %2131 = vmatprep.subr.mxu0 0.0
        %2132 = vmatpush1.msra.mxu0 0.0
        %2133 = vmatprep.subr.mxu0 0.0
        %2134 = vmatpush1.msra.mxu0 0.0
        %2135 = vmatprep.subr.mxu0 0.0
        %2136 = vmatpush1.msra.mxu0 0.0
        %2137 = vmatprep.subr.mxu0 0.0
        %2138 = vmatpush1.msra.mxu0 0.0
        %2139 = vmatprep.subr.mxu0 0.0
        %2140 = vmatpush1.msra.mxu0 0.0
        %2141 = vmatprep.subr.mxu0 0.0
        %2142 = vmatpush1.msra.mxu0 0.0
        %2143 = vmatprep.subr.mxu0 0.0
        %2144 = vmatpush1.msra.mxu0 0.0
        %2145 = vmatprep.subr.mxu0 0.0
        %2146 = vmatpush1.msra.mxu0 0.0
        %2147 = vmatprep.subr.mxu0 0.0
        %2148 = vmatpush1.msra.mxu0 0.0
        %2149 = vmatprep.subr.mxu0 0.0
        %2150 = vmatpush1.msra.mxu0 0.0
        %2151 = vmatprep.mubr.f32.mxu0 0.0
        %2152 = vmatmul.mubr.f32.gmra.mrb[0].mxu0 %v2085
        %v2153 = vpop.f32.mrb[0].mxu0
        %v2154 = vadd.f32 0.0, %v2153
        %v2155 = vpop.f32.mrb[0].mxu0
        %2156 = vdwg.mxu0
        %v2158 = vcombine.high %v2154, %v2154
        %v2160 = vunpack.c.l.s4 1966171168
        %v2161 = vunpack.c.0.s8 %v2160
        %v2162 = vlaneseq
        %v2163 = vshrl.u32 %v2162, 7
        %v2164 = vsub.s32 %v2161, %v2163
        %v2165 = vrot.slane %v2154, %v2164
        %v2167 = vunpack.c.l.s4 1966171168
        %v2168 = vunpack.c.0.s8 %v2167
        %v2169 = vlaneseq
        %v2170 = vshrl.u32 %v2169, 7
        %v2171 = vsub.s32 %v2168, %v2170
        %v2172 = vrot.slane %v2158, %v2171
        %v2173 = vcombine.high %v2165, %v2165
        %v2174 = vcombine.high %v2172, %v2172
        %v2176 = vunpack.c.l.s4 1966171168
        %v2177 = vunpack.c.0.s8 %v2176
        %v2178 = vlaneseq
        %v2179 = vshrl.u32 %v2178, 7
        %v2180 = vsub.s32 %v2177, %v2179
        %v2181 = vrot.slane %v2165, %v2180
        %v2183 = vunpack.c.l.s4 1966171168
        %v2184 = vunpack.c.0.s8 %v2183
        %v2185 = vlaneseq
        %v2186 = vshrl.u32 %v2185, 7
        %v2187 = vsub.s32 %v2184, %v2186
        %v2188 = vrot.slane %v2172, %v2187
        %v2190 = vunpack.c.l.s4 1966171168
        %v2191 = vunpack.c.0.s8 %v2190
        %v2192 = vlaneseq
        %v2193 = vshrl.u32 %v2192, 7
        %v2194 = vsub.s32 %v2191, %v2193
        %v2195 = vrot.slane %v2173, %v2194
        %v2197 = vunpack.c.l.s4 1966171168
        %v2198 = vunpack.c.0.s8 %v2197
        %v2199 = vlaneseq
        %v2200 = vshrl.u32 %v2199, 7
        %v2201 = vsub.s32 %v2198, %v2200
        %v2202 = vrot.slane %v2174, %v2201
        %v2203 = vcombine.high %v2181, %v2181
        %v2204 = vcombine.high %v2188, %v2188
        %v2205 = vcombine.high %v2195, %v2195
        %v2206 = vcombine.high %v2202, %v2202
        %s2215 = scalar_lea.vmem %s190, 12 [#allocation2]
        %2216 = vst.msk [vmem:[%s2215] sm:$0x1] %vm463, %v2181
        %2217 = vst.msk [vmem:[%s2215 + $0x10] sm:$0x1] %vm463, %v2195
        %2218 = vst.msk [vmem:[%s2215 + $0x20] sm:$0x1] %vm463, %v2203
        %2219 = vst.msk [vmem:[%s2215 + $0x30] sm:$0x1] %vm463, %v2205
        %2220 = vst.msk [vmem:[%s2215 + $0x40] sm:$0x1] %vm463, %v2188
        %2221 = vst.msk [vmem:[%s2215 + $0x50] sm:$0x1] %vm463, %v2202
        %2222 = vst.msk [vmem:[%s2215 + $0x60] sm:$0x1] %vm463, %v2204
        %2223 = vst.msk [vmem:[%s2215 + $0x70] sm:$0x1] %vm463, %v2206
        %2224 = vrot.lane.b32.xlu0 %v316, 80
        %v2225 = vpop.permute.xlu0 %2224
        %2227 = vrot.lane.b32.xlu0 %v321, 88
        %v2228 = vpop.permute.xlu0 %2227
        %v2230 = vsel %vm330, %v2225, %v2228
        %v2232 = vsel %vm226, %v2230, 0
        %2234 = vmatprep.subr.mxu0 0.0
        %2235 = vmatpush1.msra.mxu0 %v324
        %2236 = vmatprep.subr.mxu0 0.0
        %2237 = vmatpush1.msra.mxu0 %v325
        %2238 = vmatprep.subr.mxu0 0.0
        %2239 = vmatpush1.msra.mxu0 0.0
        %2240 = vmatprep.subr.mxu0 0.0
        %2241 = vmatpush1.msra.mxu0 0.0
        %2242 = vmatprep.subr.mxu0 0.0
        %2243 = vmatpush1.msra.mxu0 0.0
        %2244 = vmatprep.subr.mxu0 0.0
        %2245 = vmatpush1.msra.mxu0 0.0
        %2246 = vmatprep.subr.mxu0 0.0
        %2247 = vmatpush1.msra.mxu0 0.0
        %2248 = vmatprep.subr.mxu0 0.0
        %2249 = vmatpush1.msra.mxu0 0.0
        %2250 = vmatprep.subr.mxu0 0.0
        %2251 = vmatpush1.msra.mxu0 0.0
        %2252 = vmatprep.subr.mxu0 0.0
        %2253 = vmatpush1.msra.mxu0 0.0
        %2254 = vmatprep.subr.mxu0 0.0
        %2255 = vmatpush1.msra.mxu0 0.0
        %2256 = vmatprep.subr.mxu0 0.0
        %2257 = vmatpush1.msra.mxu0 0.0
        %2258 = vmatprep.subr.mxu0 0.0
        %2259 = vmatpush1.msra.mxu0 0.0
        %2260 = vmatprep.subr.mxu0 0.0
        %2261 = vmatpush1.msra.mxu0 0.0
        %2262 = vmatprep.subr.mxu0 0.0
        %2263 = vmatpush1.msra.mxu0 0.0
        %2264 = vmatprep.subr.mxu0 0.0
        %2265 = vmatpush1.msra.mxu0 0.0
        %2266 = vmatprep.subr.mxu0 0.0
        %2267 = vmatpush1.msra.mxu0 0.0
        %2268 = vmatprep.subr.mxu0 0.0
        %2269 = vmatpush1.msra.mxu0 0.0
        %2270 = vmatprep.subr.mxu0 0.0
        %2271 = vmatpush1.msra.mxu0 0.0
        %2272 = vmatprep.subr.mxu0 0.0
        %2273 = vmatpush1.msra.mxu0 0.0
        %2274 = vmatprep.subr.mxu0 0.0
        %2275 = vmatpush1.msra.mxu0 0.0
        %2276 = vmatprep.subr.mxu0 0.0
        %2277 = vmatpush1.msra.mxu0 0.0
        %2278 = vmatprep.subr.mxu0 0.0
        %2279 = vmatpush1.msra.mxu0 0.0
        %2280 = vmatprep.subr.mxu0 0.0
        %2281 = vmatpush1.msra.mxu0 0.0
        %2282 = vmatprep.subr.mxu0 0.0
        %2283 = vmatpush1.msra.mxu0 0.0
        %2284 = vmatprep.subr.mxu0 0.0
        %2285 = vmatpush1.msra.mxu0 0.0
        %2286 = vmatprep.subr.mxu0 0.0
        %2287 = vmatpush1.msra.mxu0 0.0
        %2288 = vmatprep.subr.mxu0 0.0
        %2289 = vmatpush1.msra.mxu0 0.0
        %2290 = vmatprep.subr.mxu0 0.0
        %2291 = vmatpush1.msra.mxu0 0.0
        %2292 = vmatprep.subr.mxu0 0.0
        %2293 = vmatpush1.msra.mxu0 0.0
        %2294 = vmatprep.subr.mxu0 0.0
        %2295 = vmatpush1.msra.mxu0 0.0
        %2296 = vmatprep.subr.mxu0 0.0
        %2297 = vmatpush1.msra.mxu0 0.0
        %2298 = vmatprep.mubr.f32.mxu0 0.0
        %2299 = vmatmul.mubr.f32.gmra.mrb[0].mxu0 %v2232
        %v2300 = vpop.f32.mrb[0].mxu0
        %v2301 = vadd.f32 0.0, %v2300
        %v2302 = vpop.f32.mrb[0].mxu0
        %2303 = vdwg.mxu0
        %v2305 = vcombine.high %v2301, %v2301
        %v2307 = vunpack.c.l.s4 1966171168
        %v2308 = vunpack.c.0.s8 %v2307
        %v2309 = vlaneseq
        %v2310 = vshrl.u32 %v2309, 7
        %v2311 = vsub.s32 %v2308, %v2310
        %v2312 = vrot.slane %v2301, %v2311
        %v2314 = vunpack.c.l.s4 1966171168
        %v2315 = vunpack.c.0.s8 %v2314
        %v2316 = vlaneseq
        %v2317 = vshrl.u32 %v2316, 7
        %v2318 = vsub.s32 %v2315, %v2317
        %v2319 = vrot.slane %v2305, %v2318
        %v2320 = vcombine.high %v2312, %v2312
        %v2321 = vcombine.high %v2319, %v2319
        %v2323 = vunpack.c.l.s4 1966171168
        %v2324 = vunpack.c.0.s8 %v2323
        %v2325 = vlaneseq
        %v2326 = vshrl.u32 %v2325, 7
        %v2327 = vsub.s32 %v2324, %v2326
        %v2328 = vrot.slane %v2312, %v2327
        %v2330 = vunpack.c.l.s4 1966171168
        %v2331 = vunpack.c.0.s8 %v2330
        %v2332 = vlaneseq
        %v2333 = vshrl.u32 %v2332, 7
        %v2334 = vsub.s32 %v2331, %v2333
        %v2335 = vrot.slane %v2319, %v2334
        %v2337 = vunpack.c.l.s4 1966171168
        %v2338 = vunpack.c.0.s8 %v2337
        %v2339 = vlaneseq
        %v2340 = vshrl.u32 %v2339, 7
        %v2341 = vsub.s32 %v2338, %v2340
        %v2342 = vrot.slane %v2320, %v2341
        %v2344 = vunpack.c.l.s4 1966171168
        %v2345 = vunpack.c.0.s8 %v2344
        %v2346 = vlaneseq
        %v2347 = vshrl.u32 %v2346, 7
        %v2348 = vsub.s32 %v2345, %v2347
        %v2349 = vrot.slane %v2321, %v2348
        %v2350 = vcombine.high %v2328, %v2328
        %v2351 = vcombine.high %v2335, %v2335
        %v2352 = vcombine.high %v2342, %v2342
        %v2353 = vcombine.high %v2349, %v2349
        %2362 = vst.msk [vmem:[%s2215 + $0x1] sm:$0x1] %vm463, %v2328
        %2363 = vst.msk [vmem:[%s2215 + $0x11] sm:$0x1] %vm463, %v2342
        %2364 = vst.msk [vmem:[%s2215 + $0x21] sm:$0x1] %vm463, %v2350
        %2365 = vst.msk [vmem:[%s2215 + $0x31] sm:$0x1] %vm463, %v2352
        %2366 = vst.msk [vmem:[%s2215 + $0x41] sm:$0x1] %vm463, %v2335
        %2367 = vst.msk [vmem:[%s2215 + $0x51] sm:$0x1] %vm463, %v2349
        %2368 = vst.msk [vmem:[%s2215 + $0x61] sm:$0x1] %vm463, %v2351
        %2369 = vst.msk [vmem:[%s2215 + $0x71] sm:$0x1] %vm463, %v2353
        %2370 = vrot.lane.b32.xlu0 %v306, 72
        %v2371 = vpop.permute.xlu0 %2370
        %2373 = vrot.lane.b32.xlu0 %v311, 80
        %v2374 = vpop.permute.xlu0 %2373
        %v2376 = vsel %vm330, %v2371, %v2374
        %v2378 = vsel %vm226, %v2376, 0
        %2380 = vmatprep.subr.mxu0 0.0
        %2381 = vmatpush1.msra.mxu0 %v324
        %2382 = vmatprep.subr.mxu0 0.0
        %2383 = vmatpush1.msra.mxu0 %v325
        %2384 = vmatprep.subr.mxu0 0.0
        %2385 = vmatpush1.msra.mxu0 0.0
        %2386 = vmatprep.subr.mxu0 0.0
        %2387 = vmatpush1.msra.mxu0 0.0
        %2388 = vmatprep.subr.mxu0 0.0
        %2389 = vmatpush1.msra.mxu0 0.0
        %2390 = vmatprep.subr.mxu0 0.0
        %2391 = vmatpush1.msra.mxu0 0.0
        %2392 = vmatprep.subr.mxu0 0.0
        %2393 = vmatpush1.msra.mxu0 0.0
        %2394 = vmatprep.subr.mxu0 0.0
        %2395 = vmatpush1.msra.mxu0 0.0
        %2396 = vmatprep.subr.mxu0 0.0
        %2397 = vmatpush1.msra.mxu0 0.0
        %2398 = vmatprep.subr.mxu0 0.0
        %2399 = vmatpush1.msra.mxu0 0.0
        %2400 = vmatprep.subr.mxu0 0.0
        %2401 = vmatpush1.msra.mxu0 0.0
        %2402 = vmatprep.subr.mxu0 0.0
        %2403 = vmatpush1.msra.mxu0 0.0
        %2404 = vmatprep.subr.mxu0 0.0
        %2405 = vmatpush1.msra.mxu0 0.0
        %2406 = vmatprep.subr.mxu0 0.0
        %2407 = vmatpush1.msra.mxu0 0.0
        %2408 = vmatprep.subr.mxu0 0.0
        %2409 = vmatpush1.msra.mxu0 0.0
        %2410 = vmatprep.subr.mxu0 0.0
        %2411 = vmatpush1.msra.mxu0 0.0
        %2412 = vmatprep.subr.mxu0 0.0
        %2413 = vmatpush1.msra.mxu0 0.0
        %2414 = vmatprep.subr.mxu0 0.0
        %2415 = vmatpush1.msra.mxu0 0.0
        %2416 = vmatprep.subr.mxu0 0.0
        %2417 = vmatpush1.msra.mxu0 0.0
        %2418 = vmatprep.subr.mxu0 0.0
        %2419 = vmatpush1.msra.mxu0 0.0
        %2420 = vmatprep.subr.mxu0 0.0
        %2421 = vmatpush1.msra.mxu0 0.0
        %2422 = vmatprep.subr.mxu0 0.0
        %2423 = vmatpush1.msra.mxu0 0.0
        %2424 = vmatprep.subr.mxu0 0.0
        %2425 = vmatpush1.msra.mxu0 0.0
        %2426 = vmatprep.subr.mxu0 0.0
        %2427 = vmatpush1.msra.mxu0 0.0
        %2428 = vmatprep.subr.mxu0 0.0
        %2429 = vmatpush1.msra.mxu0 0.0
        %2430 = vmatprep.subr.mxu0 0.0
        %2431 = vmatpush1.msra.mxu0 0.0
        %2432 = vmatprep.subr.mxu0 0.0
        %2433 = vmatpush1.msra.mxu0 0.0
        %2434 = vmatprep.subr.mxu0 0.0
        %2435 = vmatpush1.msra.mxu0 0.0
        %2436 = vmatprep.subr.mxu0 0.0
        %2437 = vmatpush1.msra.mxu0 0.0
        %2438 = vmatprep.subr.mxu0 0.0
        %2439 = vmatpush1.msra.mxu0 0.0
        %2440 = vmatprep.subr.mxu0 0.0
        %2441 = vmatpush1.msra.mxu0 0.0
        %2442 = vmatprep.subr.mxu0 0.0
        %2443 = vmatpush1.msra.mxu0 0.0
        %2444 = vmatprep.mubr.f32.mxu0 0.0
        %2445 = vmatmul.mubr.f32.gmra.mrb[0].mxu0 %v2378
        %v2446 = vpop.f32.mrb[0].mxu0
        %v2447 = vadd.f32 0.0, %v2446
        %v2448 = vpop.f32.mrb[0].mxu0
        %2449 = vdwg.mxu0
        %v2451 = vcombine.high %v2447, %v2447
        %v2453 = vunpack.c.l.s4 1966171168
        %v2454 = vunpack.c.0.s8 %v2453
        %v2455 = vlaneseq
        %v2456 = vshrl.u32 %v2455, 7
        %v2457 = vsub.s32 %v2454, %v2456
        %v2458 = vrot.slane %v2447, %v2457
        %v2460 = vunpack.c.l.s4 1966171168
        %v2461 = vunpack.c.0.s8 %v2460
        %v2462 = vlaneseq
        %v2463 = vshrl.u32 %v2462, 7
        %v2464 = vsub.s32 %v2461, %v2463
        %v2465 = vrot.slane %v2451, %v2464
        %v2466 = vcombine.high %v2458, %v2458
        %v2467 = vcombine.high %v2465, %v2465
        %v2469 = vunpack.c.l.s4 1966171168
        %v2470 = vunpack.c.0.s8 %v2469
        %v2471 = vlaneseq
        %v2472 = vshrl.u32 %v2471, 7
        %v2473 = vsub.s32 %v2470, %v2472
        %v2474 = vrot.slane %v2458, %v2473
        %v2476 = vunpack.c.l.s4 1966171168
        %v2477 = vunpack.c.0.s8 %v2476
        %v2478 = vlaneseq
        %v2479 = vshrl.u32 %v2478, 7
        %v2480 = vsub.s32 %v2477, %v2479
        %v2481 = vrot.slane %v2465, %v2480
        %v2483 = vunpack.c.l.s4 1966171168
        %v2484 = vunpack.c.0.s8 %v2483
        %v2485 = vlaneseq
        %v2486 = vshrl.u32 %v2485, 7
        %v2487 = vsub.s32 %v2484, %v2486
        %v2488 = vrot.slane %v2466, %v2487
        %v2490 = vunpack.c.l.s4 1966171168
        %v2491 = vunpack.c.0.s8 %v2490
        %v2492 = vlaneseq
        %v2493 = vshrl.u32 %v2492, 7
        %v2494 = vsub.s32 %v2491, %v2493
        %v2495 = vrot.slane %v2467, %v2494
        %v2496 = vcombine.high %v2474, %v2474
        %v2497 = vcombine.high %v2481, %v2481
        %v2498 = vcombine.high %v2488, %v2488
        %v2499 = vcombine.high %v2495, %v2495
        %s2508 = scalar_lea.vmem %s190, 14 [#allocation2]
        %2509 = vst.msk [vmem:[%s2508] sm:$0x1] %vm463, %v2474
        %2510 = vst.msk [vmem:[%s2508 + $0x10] sm:$0x1] %vm463, %v2488
        %2511 = vst.msk [vmem:[%s2508 + $0x20] sm:$0x1] %vm463, %v2496
        %2512 = vst.msk [vmem:[%s2508 + $0x30] sm:$0x1] %vm463, %v2498
        %2513 = vst.msk [vmem:[%s2508 + $0x40] sm:$0x1] %vm463, %v2481
        %2514 = vst.msk [vmem:[%s2508 + $0x50] sm:$0x1] %vm463, %v2495
        %2515 = vst.msk [vmem:[%s2508 + $0x60] sm:$0x1] %vm463, %v2497
        %2516 = vst.msk [vmem:[%s2508 + $0x70] sm:$0x1] %vm463, %v2499
        %2517 = vrot.lane.b32.xlu0 %v316, 72
        %v2518 = vpop.permute.xlu0 %2517
        %2520 = vrot.lane.b32.xlu0 %v321, 80
        %v2521 = vpop.permute.xlu0 %2520
        %v2523 = vsel %vm330, %v2518, %v2521
        %v2525 = vsel %vm226, %v2523, 0
        %2527 = vmatprep.subr.mxu0 0.0
        %2528 = vmatpush1.msra.mxu0 %v324
        %2529 = vmatprep.subr.mxu0 0.0
        %2530 = vmatpush1.msra.mxu0 %v325
        %2531 = vmatprep.subr.mxu0 0.0
        %2532 = vmatpush1.msra.mxu0 0.0
        %2533 = vmatprep.subr.mxu0 0.0
        %2534 = vmatpush1.msra.mxu0 0.0
        %2535 = vmatprep.subr.mxu0 0.0
        %2536 = vmatpush1.msra.mxu0 0.0
        %2537 = vmatprep.subr.mxu0 0.0
        %2538 = vmatpush1.msra.mxu0 0.0
        %2539 = vmatprep.subr.mxu0 0.0
        %2540 = vmatpush1.msra.mxu0 0.0
        %2541 = vmatprep.subr.mxu0 0.0
        %2542 = vmatpush1.msra.mxu0 0.0
        %2543 = vmatprep.subr.mxu0 0.0
        %2544 = vmatpush1.msra.mxu0 0.0
        %2545 = vmatprep.subr.mxu0 0.0
        %2546 = vmatpush1.msra.mxu0 0.0
        %2547 = vmatprep.subr.mxu0 0.0
        %2548 = vmatpush1.msra.mxu0 0.0
        %2549 = vmatprep.subr.mxu0 0.0
        %2550 = vmatpush1.msra.mxu0 0.0
        %2551 = vmatprep.subr.mxu0 0.0
        %2552 = vmatpush1.msra.mxu0 0.0
        %2553 = vmatprep.subr.mxu0 0.0
        %2554 = vmatpush1.msra.mxu0 0.0
        %2555 = vmatprep.subr.mxu0 0.0
        %2556 = vmatpush1.msra.mxu0 0.0
        %2557 = vmatprep.subr.mxu0 0.0
        %2558 = vmatpush1.msra.mxu0 0.0
        %2559 = vmatprep.subr.mxu0 0.0
        %2560 = vmatpush1.msra.mxu0 0.0
        %2561 = vmatprep.subr.mxu0 0.0
        %2562 = vmatpush1.msra.mxu0 0.0
        %2563 = vmatprep.subr.mxu0 0.0
        %2564 = vmatpush1.msra.mxu0 0.0
        %2565 = vmatprep.subr.mxu0 0.0
        %2566 = vmatpush1.msra.mxu0 0.0
        %2567 = vmatprep.subr.mxu0 0.0
        %2568 = vmatpush1.msra.mxu0 0.0
        %2569 = vmatprep.subr.mxu0 0.0
        %2570 = vmatpush1.msra.mxu0 0.0
        %2571 = vmatprep.subr.mxu0 0.0
        %2572 = vmatpush1.msra.mxu0 0.0
        %2573 = vmatprep.subr.mxu0 0.0
        %2574 = vmatpush1.msra.mxu0 0.0
        %2575 = vmatprep.subr.mxu0 0.0
        %2576 = vmatpush1.msra.mxu0 0.0
        %2577 = vmatprep.subr.mxu0 0.0
        %2578 = vmatpush1.msra.mxu0 0.0
        %2579 = vmatprep.subr.mxu0 0.0
        %2580 = vmatpush1.msra.mxu0 0.0
        %2581 = vmatprep.subr.mxu0 0.0
        %2582 = vmatpush1.msra.mxu0 0.0
        %2583 = vmatprep.subr.mxu0 0.0
        %2584 = vmatpush1.msra.mxu0 0.0
        %2585 = vmatprep.subr.mxu0 0.0
        %2586 = vmatpush1.msra.mxu0 0.0
        %2587 = vmatprep.subr.mxu0 0.0
        %2588 = vmatpush1.msra.mxu0 0.0
        %2589 = vmatprep.subr.mxu0 0.0
        %2590 = vmatpush1.msra.mxu0 0.0
        %2591 = vmatprep.mubr.f32.mxu0 0.0
        %2592 = vmatmul.mubr.f32.gmra.mrb[0].mxu0 %v2525
        %v2593 = vpop.f32.mrb[0].mxu0
        %v2594 = vadd.f32 0.0, %v2593
        %v2595 = vpop.f32.mrb[0].mxu0
        %2596 = vdwg.mxu0
        %v2598 = vcombine.high %v2594, %v2594
        %v2600 = vunpack.c.l.s4 1966171168
        %v2601 = vunpack.c.0.s8 %v2600
        %v2602 = vlaneseq
        %v2603 = vshrl.u32 %v2602, 7
        %v2604 = vsub.s32 %v2601, %v2603
        %v2605 = vrot.slane %v2594, %v2604
        %v2607 = vunpack.c.l.s4 1966171168
        %v2608 = vunpack.c.0.s8 %v2607
        %v2609 = vlaneseq
        %v2610 = vshrl.u32 %v2609, 7
        %v2611 = vsub.s32 %v2608, %v2610
        %v2612 = vrot.slane %v2598, %v2611
        %v2613 = vcombine.high %v2605, %v2605
        %v2614 = vcombine.high %v2612, %v2612
        %v2616 = vunpack.c.l.s4 1966171168
        %v2617 = vunpack.c.0.s8 %v2616
        %v2618 = vlaneseq
        %v2619 = vshrl.u32 %v2618, 7
        %v2620 = vsub.s32 %v2617, %v2619
        %v2621 = vrot.slane %v2605, %v2620
        %v2623 = vunpack.c.l.s4 1966171168
        %v2624 = vunpack.c.0.s8 %v2623
        %v2625 = vlaneseq
        %v2626 = vshrl.u32 %v2625, 7
        %v2627 = vsub.s32 %v2624, %v2626
        %v2628 = vrot.slane %v2612, %v2627
        %v2630 = vunpack.c.l.s4 1966171168
        %v2631 = vunpack.c.0.s8 %v2630
        %v2632 = vlaneseq
        %v2633 = vshrl.u32 %v2632, 7
        %v2634 = vsub.s32 %v2631, %v2633
        %v2635 = vrot.slane %v2613, %v2634
        %v2637 = vunpack.c.l.s4 1966171168
        %v2638 = vunpack.c.0.s8 %v2637
        %v2639 = vlaneseq
        %v2640 = vshrl.u32 %v2639, 7
        %v2641 = vsub.s32 %v2638, %v2640
        %v2642 = vrot.slane %v2614, %v2641
        %v2643 = vcombine.high %v2621, %v2621
        %v2644 = vcombine.high %v2628, %v2628
        %v2645 = vcombine.high %v2635, %v2635
        %v2646 = vcombine.high %v2642, %v2642
        %2655 = vst.msk [vmem:[%s2508 + $0x1] sm:$0x1] %vm463, %v2621
        %2656 = vst.msk [vmem:[%s2508 + $0x11] sm:$0x1] %vm463, %v2635
        %2657 = vst.msk [vmem:[%s2508 + $0x21] sm:$0x1] %vm463, %v2643
        %2658 = vst.msk [vmem:[%s2508 + $0x31] sm:$0x1] %vm463, %v2645
        %2659 = vst.msk [vmem:[%s2508 + $0x41] sm:$0x1] %vm463, %v2628
        %2660 = vst.msk [vmem:[%s2508 + $0x51] sm:$0x1] %vm463, %v2642
        %2661 = vst.msk [vmem:[%s2508 + $0x61] sm:$0x1] %vm463, %v2644
        %2662 = vst.msk [vmem:[%s2508 + $0x71] sm:$0x1] %vm463, %v2646
        %s2663 = sand.u32 %s115, 1
        %s2664 = scalar_lea.sflag [#allocation3], %s2663
        %s2665 = sand.u32 %s115, 1
        %s2666 = smul.addr %s2665, 128
        %s2667 = scalar_lea.vmem [#allocation2], %s2666
        // Predicated region
        $region37: #{tpu_custom_call.1} parent=35 // pred_check
          %p2668 = pneg %p125
        $region38: #{tpu_custom_call.1} parent=35 // pred_check_branch
          %2670 = sbr.rel (%p2668) target = $region40
        $region39: #{tpu_custom_call.1} parent=35 // pred_region
          %s2672 = ssub.s32 2048, 2048
          %2673 = vsyncadd %s2664, %s2672
          %s2674 = smul.addr %s18, 64
          %s2675 = smul.addr %s2674, 32
          %s2676 = scalar_lea.hbm %s4, %s2675
          %s2677 = sshll.u32 %s2667, 4
          %s2678 = int_to_ptr.vmem [resolvable:$true] %s2677
          %2683 = dma.vmem_to_hbm [thread:$0]  %s2678, 2048, %s2676, %s2664, 32, 32, 2
        $region40: #{tpu_custom_call.1} parent=35 // pred_fallthru
          _
      $region36: #{tpu_custom_call.1} parent=5 // pred_fallthru
        _
      %p2684 = scmp.le.s32.totalorder 2, %s13
      // Predicated region
      $region41: #{tpu_custom_call.1} parent=5 // pred_check
        %p2685 = pneg %p2684
      $region42: #{tpu_custom_call.1} parent=5 // pred_check_branch
        %2687 = sbr.rel (%p2685) target = $region44
      $region43: #{tpu_custom_call.1} parent=5 // pred_region
        %s2688 = ssub.s32 %s13, 2
        // Predicated region
        $region45: #{tpu_custom_call.1} parent=43 // pred_check
          %p2689 = pneg %p131
        $region46: #{tpu_custom_call.1} parent=43 // pred_check_branch
          %2691 = sbr.rel (%p2689) target = $region48
        $region47: #{tpu_custom_call.1} parent=43 // pred_region
          %s2692 = sand.u32 %s116, 1
          %s2693 = scalar_lea.sflag [#allocation3], %s2692
          %s2694 = sand.u32 %s116, 1
          %s2695 = smul.addr %s2694, 128
          %s2696 = scalar_lea.vmem [#allocation2], %s2695
          %2697 = dma.done %s2693, 2048
        $region48: #{tpu_custom_call.1} parent=43 // pred_fallthru
          _
      $region44: #{tpu_custom_call.1} parent=5 // pred_fallthru
        _
    $region6: #{tpu_custom_call.1} parent=1 // loop_footer
      %s17 = sadd.s32 1, %s13
    $region7: #{tpu_custom_call.1} parent=1 // loop_footer_branch
      %12 = sbr.rel target = $region3
    $region8: #{tpu_custom_call.1} parent=1 // loop_exit
      _
    %2698 = vsyncpa [#allocation3], 1
    %s2699 = scalar_lea.sflag [#allocation3], 1
    %2700 = vsyncpa %s2699, 1

</llo_original>
